<compile_context>
chip_gen: v6e
topology: v6e:2x2x1
jax: 0.10.0
libtpu: 0.0.40
codegen_flags: <defaults>
</compile_context>

<pallas_src>
import functools
import math

import jax
import jax.numpy as jnp
from jax.experimental import pallas as pl
from jax.experimental.pallas import tpu as pltpu  # noqa: F401  (TPU backend)


# ---------------------------------------------------------------------------
# Config (shapes implied by BERT_SPC_CL.__init__ with a tiny injected BERT)
# ---------------------------------------------------------------------------
CFG = dict(
    vocab=30,
    type_vocab=2,
    max_pos=16,
    hidden=32,          # opt.bert_dim
    num_heads=2,
    head_dim=16,
    intermediate=64,
    num_layers=1,
    polarities=3,       # opt.polarities_dim
)
LN_EPS = 1e-12


def _spec(shape):
    # Whole-array block (no grid): single kernel invocation, everything in VMEM.
    return pl.BlockSpec(shape, lambda *_: (0,) * len(shape))


# ---------------------------------------------------------------------------
# Fused forward kernel
# ---------------------------------------------------------------------------
def _fused_forward_kernel(
    emb_ref,
    emb_g_ref, emb_b_ref,
    wqkv_ref, bqkv_ref, wo_ref, bo_ref,
    ln1_g_ref, ln1_b_ref,
    w1_ref, b1_ref, w2_ref, b2_ref,
    ln2_g_ref, ln2_b_ref,
    pool_w_ref, pool_b_ref,
    head_w_ref, head_b_ref,
    logits_ref, pooled_ref,
    *, num_layers, batch, seq, num_heads, head_dim,
):
    hdim = num_heads * head_dim
    scale = 1.0 / math.sqrt(head_dim)

    def ln(x, g, b):
        mean = jnp.mean(x, axis=-1, keepdims=True)
        var = jnp.mean(jnp.square(x - mean), axis=-1, keepdims=True)
        return (x - mean) * jax.lax.rsqrt(var + LN_EPS) * g + b

    def gelu(x):  # tanh approximation (EUP path; avoids erf VALU polynomial)
        c = math.sqrt(2.0 / math.pi)
        return 0.5 * x * (1.0 + jnp.tanh(c * (x + 0.044715 * x * x * x)))

    # --- embedding LayerNorm ---
    x = ln(emb_ref[...].astype(jnp.float32), emb_g_ref[...], emb_b_ref[...])

    # --- transformer encoder layer(s), statically unrolled ---
    for l in range(num_layers):
        qkv = jnp.dot(x, wqkv_ref[l], preferred_element_type=jnp.float32) + bqkv_ref[l]

        ctx_heads = []
        for h in range(num_heads):
            lo = h * head_dim
            qh = (qkv[:, lo:lo + head_dim] * scale).reshape(batch, seq, head_dim)
            kh = qkv[:, hdim + lo:hdim + lo + head_dim].reshape(batch, seq, head_dim)
            vh = qkv[:, 2 * hdim + lo:2 * hdim + lo + head_dim].reshape(batch, seq, head_dim)

            s = jnp.einsum("bqd,bkd->bqk", qh, kh, preferred_element_type=jnp.float32)
            s = s - jnp.max(s, axis=-1, keepdims=True)
            p = jnp.exp(s)
            p = p * pl.reciprocal(jnp.sum(p, axis=-1, keepdims=True), approx=True)
            ctx = jnp.einsum("bqk,bkd->bqd", p, vh, preferred_element_type=jnp.float32)
            ctx_heads.append(ctx.reshape(batch * seq, head_dim))

        ctx = jnp.concatenate(ctx_heads, axis=-1)  # back to lane-dense [rows, H]
        attn_out = jnp.dot(ctx, wo_ref[l], preferred_element_type=jnp.float32) + bo_ref[l]
        x = ln(x + attn_out, ln1_g_ref[l], ln1_b_ref[l])

        ff = gelu(jnp.dot(x, w1_ref[l], preferred_element_type=jnp.float32) + b1_ref[l])
        ff = jnp.dot(ff, w2_ref[l], preferred_element_type=jnp.float32) + b2_ref[l]
        x = ln(x + ff, ln2_g_ref[l], ln2_b_ref[l])

    # --- pooler: tanh(W @ hidden[:, 0]) ---
    cls = x.reshape(batch, seq, hdim)[:, 0, :]
    pooled = jnp.tanh(
        jnp.dot(cls, pool_w_ref[...], preferred_element_type=jnp.float32) + pool_b_ref[...]
    )

    # TODO(synk): training-mode dropout on pooled_output is not applied (eval-mode identity).

    # --- fused classification heads: one (H, polarities+2) matmul ---
    logits_cat = (
        jnp.dot(pooled, head_w_ref[...], preferred_element_type=jnp.float32) + head_b_ref[...]
    )

    pooled_ref[...] = pooled.astype(pooled_ref.dtype)
    logits_ref[...] = logits_cat.astype(logits_ref.dtype)


# ---------------------------------------------------------------------------
# Parameter construction
# ---------------------------------------------------------------------------
def init_params(key):
    c = CFG
    ks = iter(jax.random.split(key, 64))

    def w(shape, scale=0.02):
        return (scale * jax.random.normal(next(ks), shape)).astype(jnp.float32)

    def zeros(shape):
        return jnp.zeros(shape, jnp.float32)

    def ones(shape):
        return jnp.ones(shape, jnp.float32)

    h, inter = c["hidden"], c["intermediate"]
    layers = []
    for _ in range(c["num_layers"]):
        layers.append(
            dict(
                wq=w((h, h)), bq=zeros((h,)),
                wk=w((h, h)), bk=zeros((h,)),
                wv=w((h, h)), bv=zeros((h,)),
                wo=w((h, h)), bo=zeros((h,)),
                ln1_g=ones((h,)), ln1_b=zeros((h,)),
                w1=w((h, inter)), b1=zeros((inter,)),
                w2=w((inter, h)), b2=zeros((h,)),
                ln2_g=ones((h,)), ln2_b=zeros((h,)),
            )
        )

    return dict(
        word_emb=w((c["vocab"], h)),
        pos_emb=w((c["max_pos"], h)),
        type_emb=w((c["type_vocab"], h)),
        emb_ln_g=ones((h,)), emb_ln_b=zeros((h,)),
        layers=layers,
        pool_w=w((h, h)), pool_b=zeros((h,)),
        dense_w=w((h, c["polarities"])), dense_b=zeros((c["polarities"],)),
        dense2_w=w((h, 2)), dense2_b=zeros((2,)),
    )


def fuse_params(params):
    """One-time packing: concat QKV, concat heads, stack per-layer weights."""
    c = CFG
    h = c["hidden"]
    layers = params["layers"]

    def stack_w(name):
        return jnp.stack([lp[name] for lp in layers])

    def stack_b(name):
        return jnp.stack([lp[name].reshape(1, -1) for lp in layers])

    wqkv = jnp.stack(
        [jnp.concatenate([lp["wq"], lp["wk"], lp["wv"]], axis=1) for lp in layers]
    )  # (L, H, 3H)
    bqkv = jnp.stack(
        [jnp.concatenate([lp["bq"], lp["bk"], lp["bv"]]).reshape(1, -1) for lp in layers]
    )  # (L, 1, 3H)

    head_w = jnp.concatenate([params["dense_w"], params["dense2_w"]], axis=1)   # (H, pol+2)
    head_b = jnp.concatenate([params["dense_b"], params["dense2_b"]]).reshape(1, -1)

    return dict(
        word_emb=params["word_emb"],
        pos_emb=params["pos_emb"],
        type_emb=params["type_emb"],
        emb_ln_g=params["emb_ln_g"].reshape(1, h),
        emb_ln_b=params["emb_ln_b"].reshape(1, h),
        wqkv=wqkv, bqkv=bqkv,
        wo=stack_w("wo"), bo=stack_b("bo"),
        ln1_g=stack_b("ln1_g"), ln1_b=stack_b("ln1_b"),
        w1=stack_w("w1"), b1=stack_b("b1"),
        w2=stack_w("w2"), b2=stack_b("b2"),
        ln2_g=stack_b("ln2_g"), ln2_b=stack_b("ln2_b"),
        pool_w=params["pool_w"], pool_b=params["pool_b"].reshape(1, h),
        head_w=head_w, head_b=head_b,
    )


# ---------------------------------------------------------------------------
# Forward pass == BERT_SPC_CL.forward
# ---------------------------------------------------------------------------
@jax.jit
def bert_spc_cl_forward(fused, text_bert_indices, bert_segments_ids):
    c = CFG
    B, S = text_bert_indices.shape
    H = c["hidden"]
    npol = c["polarities"]

    # --- BERT embeddings (gathers stay in JAX glue; no padding -> no attn mask) ---
    positions = jnp.arange(S)
    emb = (
        fused["word_emb"][text_bert_indices]
        + fused["pos_emb"][positions][None, :, :]
        + fused["type_emb"][bert_segments_ids]
    )
    emb = emb.reshape(B * S, H)

    kernel = functools.partial(
        _fused_forward_kernel,
        num_layers=c["num_layers"],
        batch=B, seq=S,
        num_heads=c["num_heads"], head_dim=c["head_dim"],
    )

    operands = (
        emb,
        fused["emb_ln_g"], fused["emb_ln_b"],
        fused["wqkv"], fused["bqkv"], fused["wo"], fused["bo"],
        fused["ln1_g"], fused["ln1_b"],
        fused["w1"], fused["b1"], fused["w2"], fused["b2"],
        fused["ln2_g"], fused["ln2_b"],
        fused["pool_w"], fused["pool_b"],
        fused["head_w"], fused["head_b"],
    )

    logits_cat, pooled_output = pl.pallas_call(
        kernel,
        out_shape=(
            jax.ShapeDtypeStruct((B, npol + 2), jnp.float32),
            jax.ShapeDtypeStruct((B, H), jnp.float32),
        ),
        in_specs=[_spec(op.shape) for op in operands],
        out_specs=(_spec((B, npol + 2)), _spec((B, H))),
    )(*operands)

    logits = logits_cat[:, :npol]
    logits2 = logits_cat[:, npol:]
    return logits, pooled_output, logits2


# ---------------------------------------------------------------------------
if __name__ == "__main__":
    key = jax.random.PRNGKey(0)
    pkey, ikey, skey = jax.random.split(key, 3)

    params = init_params(pkey)
    fused = fuse_params(params)

    B, S = 2, 8
    text_bert_indices = jax.random.randint(ikey, (B, S), 0, CFG["vocab"], dtype=jnp.int32)
    bert_segments_ids = jax.random.randint(skey, (B, S), 0, CFG["type_vocab"], dtype=jnp.int32)

    logits, pooled_output, logits2 = bert_spc_cl_forward(
        fused, text_bert_indices, bert_segments_ids
    )
    jax.block_until_ready((logits, pooled_output, logits2))

    assert logits.shape == (B, CFG["polarities"])
    assert pooled_output.shape == (B, CFG["hidden"])
    assert logits2.shape == (B, 2)
    print("KERNEL_OK")
</pallas_src>

<mosaic_0001>
module attributes {stable_mosaic.version = 11 : i64} {
  func.func @_fused_forward_kernel(%arg0: memref<16x32xf32, #tpu.memory_space<vmem>>, %arg1: memref<1x32xf32, #tpu.memory_space<vmem>>, %arg2: memref<1x32xf32, #tpu.memory_space<vmem>>, %arg3: memref<1x32x96xf32, #tpu.memory_space<vmem>>, %arg4: memref<1x1x96xf32, #tpu.memory_space<vmem>>, %arg5: memref<1x32x32xf32, #tpu.memory_space<vmem>>, %arg6: memref<1x1x32xf32, #tpu.memory_space<vmem>>, %arg7: memref<1x1x32xf32, #tpu.memory_space<vmem>>, %arg8: memref<1x1x32xf32, #tpu.memory_space<vmem>>, %arg9: memref<1x32x64xf32, #tpu.memory_space<vmem>>, %arg10: memref<1x1x64xf32, #tpu.memory_space<vmem>>, %arg11: memref<1x64x32xf32, #tpu.memory_space<vmem>>, %arg12: memref<1x1x32xf32, #tpu.memory_space<vmem>>, %arg13: memref<1x1x32xf32, #tpu.memory_space<vmem>>, %arg14: memref<1x1x32xf32, #tpu.memory_space<vmem>>, %arg15: memref<32x32xf32, #tpu.memory_space<vmem>>, %arg16: memref<1x32xf32, #tpu.memory_space<vmem>>, %arg17: memref<32x5xf32, #tpu.memory_space<vmem>>, %arg18: memref<1x5xf32, #tpu.memory_space<vmem>>, %arg19: memref<2x5xf32, #tpu.memory_space<vmem>>, %arg20: memref<2x32xf32, #tpu.memory_space<vmem>>) attributes {dimension_semantics = [], scalar_prefetch = 0 : i64, scratch_operands = 0 : i64, tpu.core_type = #tpu.core_type<tc>} {
    %c0 = arith.constant 0 : index
    %c0_0 = arith.constant 0 : index
    %0 = vector.load %arg0[%c0, %c0_0] : memref<16x32xf32, #tpu.memory_space<vmem>>, vector<16x32xf32>
    %c0_1 = arith.constant 0 : index
    %c0_2 = arith.constant 0 : index
    %1 = vector.load %arg1[%c0_1, %c0_2] : memref<1x32xf32, #tpu.memory_space<vmem>>, vector<1x32xf32>
    %c0_3 = arith.constant 0 : index
    %c0_4 = arith.constant 0 : index
    %2 = vector.load %arg2[%c0_3, %c0_4] : memref<1x32xf32, #tpu.memory_space<vmem>>, vector<1x32xf32>
    %cst = arith.constant dense<0.000000e+00> : vector<16xf32>
    %3 = vector.multi_reduction <add>, %0, %cst [1] : vector<16x32xf32> to vector<16xf32>
    %4 = vector.shape_cast %3 : vector<16xf32> to vector<16x1xf32>
    %cst_5 = arith.constant 3.200000e+01 : f32
    %5 = vector.broadcast %cst_5 : f32 to vector<16x1xf32>
    %6 = arith.divf %4, %5 : vector<16x1xf32>
    %7 = vector.broadcast %6 : vector<16x1xf32> to vector<16x32xf32>
    %8 = arith.subf %0, %7 : vector<16x32xf32>
    %9 = arith.mulf %8, %8 : vector<16x32xf32>
    %cst_6 = arith.constant dense<0.000000e+00> : vector<16xf32>
    %10 = vector.multi_reduction <add>, %9, %cst_6 [1] : vector<16x32xf32> to vector<16xf32>
    %11 = vector.shape_cast %10 : vector<16xf32> to vector<16x1xf32>
    %cst_7 = arith.constant 3.200000e+01 : f32
    %12 = vector.broadcast %cst_7 : f32 to vector<16x1xf32>
    %13 = arith.divf %11, %12 : vector<16x1xf32>
    %14 = vector.broadcast %6 : vector<16x1xf32> to vector<16x32xf32>
    %15 = arith.subf %0, %14 : vector<16x32xf32>
    %cst_8 = arith.constant 9.99999996E-13 : f32
    %16 = vector.broadcast %cst_8 : f32 to vector<16x1xf32>
    %17 = arith.addf %13, %16 : vector<16x1xf32>
    %18 = math.rsqrt %17 : vector<16x1xf32>
    %19 = vector.broadcast %18 : vector<16x1xf32> to vector<16x32xf32>
    %20 = arith.mulf %15, %19 : vector<16x32xf32>
    %21 = vector.broadcast %1 : vector<1x32xf32> to vector<16x32xf32>
    %22 = arith.mulf %20, %21 : vector<16x32xf32>
    %23 = vector.broadcast %2 : vector<1x32xf32> to vector<16x32xf32>
    %24 = arith.addf %22, %23 : vector<16x32xf32>
    %c0_9 = arith.constant 0 : index
    %c0_10 = arith.constant 0 : index
    %c0_11 = arith.constant 0 : index
    %25 = vector.load %arg3[%c0_9, %c0_10, %c0_11] : memref<1x32x96xf32, #tpu.memory_space<vmem>>, vector<1x32x96xf32>
    %26 = vector.shape_cast %25 : vector<1x32x96xf32> to vector<32x96xf32>
    %cst_12 = arith.constant dense<0.000000e+00> : vector<16x96xf32>
    %27 = tpu.matmul %24, %26, %cst_12 {dimension_numbers = #tpu.dot_dimension_numbers<[1], [0], [0], [1], [0, 0, 1, 1], [], []>} : vector<16x32xf32>, vector<32x96xf32>, vector<16x96xf32> -> vector<16x96xf32>
    %c0_13 = arith.constant 0 : index
    %c0_14 = arith.constant 0 : index
    %c0_15 = arith.constant 0 : index
    %28 = vector.load %arg4[%c0_13, %c0_14, %c0_15] : memref<1x1x96xf32, #tpu.memory_space<vmem>>, vector<1x1x96xf32>
    %29 = vector.shape_cast %28 : vector<1x1x96xf32> to vector<1x96xf32>
    %30 = vector.broadcast %29 : vector<1x96xf32> to vector<16x96xf32>
    %31 = arith.addf %27, %30 : vector<16x96xf32>
    %32 = vector.extract_strided_slice %31 {offsets = [0, 0], sizes = [16, 16], strides = [1, 1]} : vector<16x96xf32> to vector<16x16xf32>
    %cst_16 = arith.constant 2.500000e-01 : f32
    %33 = vector.broadcast %cst_16 : f32 to vector<16x16xf32>
    %34 = arith.mulf %32, %33 : vector<16x16xf32>
    %35 = vector.shape_cast %34 : vector<16x16xf32> to vector<2x8x16xf32>
    %36 = vector.extract_strided_slice %31 {offsets = [0, 32], sizes = [16, 16], strides = [1, 1]} : vector<16x96xf32> to vector<16x16xf32>
    %37 = vector.shape_cast %36 : vector<16x16xf32> to vector<2x8x16xf32>
    %38 = vector.extract_strided_slice %31 {offsets = [0, 64], sizes = [16, 16], strides = [1, 1]} : vector<16x96xf32> to vector<16x16xf32>
    %39 = vector.shape_cast %38 : vector<16x16xf32> to vector<2x8x16xf32>
    "tpu.trace_start"() <{level = 10 : i32, message = "bqd,bkd->bqk"}> : () -> ()
    %cst_17 = arith.constant dense<0.000000e+00> : vector<2x8x8xf32>
    %40 = tpu.matmul %35, %37, %cst_17 {dimension_numbers = #tpu.dot_dimension_numbers<[2], [2], [1], [1], [0, 0, 0, 1, 1, 1], [0], [0]>} : vector<2x8x16xf32>, vector<2x8x16xf32>, vector<2x8x8xf32> -> vector<2x8x8xf32>
    "tpu.trace_stop"() : () -> ()
    %cst_18 = arith.constant dense<0xFF800000> : vector<2x8xf32>
    %41 = vector.multi_reduction <maximumf>, %40, %cst_18 [2] : vector<2x8x8xf32> to vector<2x8xf32>
    %42 = vector.shape_cast %41 : vector<2x8xf32> to vector<2x8x1xf32>
    %43 = vector.broadcast %42 : vector<2x8x1xf32> to vector<2x8x8xf32>
    %44 = arith.subf %40, %43 : vector<2x8x8xf32>
    %45 = math.exp %44 : vector<2x8x8xf32>
    %cst_19 = arith.constant dense<0.000000e+00> : vector<2x8xf32>
    %46 = vector.multi_reduction <add>, %45, %cst_19 [2] : vector<2x8x8xf32> to vector<2x8xf32>
    %47 = vector.shape_cast %46 : vector<2x8xf32> to vector<2x8x1xf32>
    %48 = tpu.reciprocal %47 {approx = true} : vector<2x8x1xf32> -> vector<2x8x1xf32>
    %49 = vector.broadcast %48 : vector<2x8x1xf32> to vector<2x8x8xf32>
    %50 = arith.mulf %45, %49 : vector<2x8x8xf32>
    "tpu.trace_start"() <{level = 10 : i32, message = "bqk,bkd->bqd"}> : () -> ()
    %cst_20 = arith.constant dense<0.000000e+00> : vector<2x8x16xf32>
    %51 = tpu.matmul %50, %39, %cst_20 {dimension_numbers = #tpu.dot_dimension_numbers<[2], [1], [1], [2], [0, 0, 0, 1, 1, 2], [0], [0]>} : vector<2x8x8xf32>, vector<2x8x16xf32>, vector<2x8x16xf32> -> vector<2x8x16xf32>
    "tpu.trace_stop"() : () -> ()
    %52 = vector.shape_cast %51 : vector<2x8x16xf32> to vector<16x16xf32>
    %53 = vector.extract_strided_slice %31 {offsets = [0, 16], sizes = [16, 16], strides = [1, 1]} : vector<16x96xf32> to vector<16x16xf32>
    %cst_21 = arith.constant 2.500000e-01 : f32
    %54 = vector.broadcast %cst_21 : f32 to vector<16x16xf32>
    %55 = arith.mulf %53, %54 : vector<16x16xf32>
    %56 = vector.shape_cast %55 : vector<16x16xf32> to vector<2x8x16xf32>
    %57 = vector.extract_strided_slice %31 {offsets = [0, 48], sizes = [16, 16], strides = [1, 1]} : vector<16x96xf32> to vector<16x16xf32>
    %58 = vector.shape_cast %57 : vector<16x16xf32> to vector<2x8x16xf32>
    %59 = vector.extract_strided_slice %31 {offsets = [0, 80], sizes = [16, 16], strides = [1, 1]} : vector<16x96xf32> to vector<16x16xf32>
    %60 = vector.shape_cast %59 : vector<16x16xf32> to vector<2x8x16xf32>
    "tpu.trace_start"() <{level = 10 : i32, message = "bqd,bkd->bqk"}> : () -> ()
    %cst_22 = arith.constant dense<0.000000e+00> : vector<2x8x8xf32>
    %61 = tpu.matmul %56, %58, %cst_22 {dimension_numbers = #tpu.dot_dimension_numbers<[2], [2], [1], [1], [0, 0, 0, 1, 1, 1], [0], [0]>} : vector<2x8x16xf32>, vector<2x8x16xf32>, vector<2x8x8xf32> -> vector<2x8x8xf32>
    "tpu.trace_stop"() : () -> ()
    %cst_23 = arith.constant dense<0xFF800000> : vector<2x8xf32>
    %62 = vector.multi_reduction <maximumf>, %61, %cst_23 [2] : vector<2x8x8xf32> to vector<2x8xf32>
    %63 = vector.shape_cast %62 : vector<2x8xf32> to vector<2x8x1xf32>
    %64 = vector.broadcast %63 : vector<2x8x1xf32> to vector<2x8x8xf32>
    %65 = arith.subf %61, %64 : vector<2x8x8xf32>
    %66 = math.exp %65 : vector<2x8x8xf32>
    %cst_24 = arith.constant dense<0.000000e+00> : vector<2x8xf32>
    %67 = vector.multi_reduction <add>, %66, %cst_24 [2] : vector<2x8x8xf32> to vector<2x8xf32>
    %68 = vector.shape_cast %67 : vector<2x8xf32> to vector<2x8x1xf32>
    %69 = tpu.reciprocal %68 {approx = true} : vector<2x8x1xf32> -> vector<2x8x1xf32>
    %70 = vector.broadcast %69 : vector<2x8x1xf32> to vector<2x8x8xf32>
    %71 = arith.mulf %66, %70 : vector<2x8x8xf32>
    "tpu.trace_start"() <{level = 10 : i32, message = "bqk,bkd->bqd"}> : () -> ()
    %cst_25 = arith.constant dense<0.000000e+00> : vector<2x8x16xf32>
    %72 = tpu.matmul %71, %60, %cst_25 {dimension_numbers = #tpu.dot_dimension_numbers<[2], [1], [1], [2], [0, 0, 0, 1, 1, 2], [0], [0]>} : vector<2x8x8xf32>, vector<2x8x16xf32>, vector<2x8x16xf32> -> vector<2x8x16xf32>
    "tpu.trace_stop"() : () -> ()
    %73 = vector.shape_cast %72 : vector<2x8x16xf32> to vector<16x16xf32>
    %74 = tpu.concatenate %52, %73 in 1 : vector<16x16xf32>, vector<16x16xf32> -> vector<16x32xf32>
    %c0_26 = arith.constant 0 : index
    %c0_27 = arith.constant 0 : index
    %c0_28 = arith.constant 0 : index
    %75 = vector.load %arg5[%c0_26, %c0_27, %c0_28] : memref<1x32x32xf32, #tpu.memory_space<vmem>>, vector<1x32x32xf32>
    %76 = vector.shape_cast %75 : vector<1x32x32xf32> to vector<32x32xf32>
    %cst_29 = arith.constant dense<0.000000e+00> : vector<16x32xf32>
    %77 = tpu.matmul %74, %76, %cst_29 {dimension_numbers = #tpu.dot_dimension_numbers<[1], [0], [0], [1], [0, 0, 1, 1], [], []>} : vector<16x32xf32>, vector<32x32xf32>, vector<16x32xf32> -> vector<16x32xf32>
    %c0_30 = arith.constant 0 : index
    %c0_31 = arith.constant 0 : index
    %c0_32 = arith.constant 0 : index
    %78 = vector.load %arg6[%c0_30, %c0_31, %c0_32] : memref<1x1x32xf32, #tpu.memory_space<vmem>>, vector<1x1x32xf32>
    %79 = vector.shape_cast %78 : vector<1x1x32xf32> to vector<1x32xf32>
    %80 = vector.broadcast %79 : vector<1x32xf32> to vector<16x32xf32>
    %81 = arith.addf %77, %80 : vector<16x32xf32>
    %82 = arith.addf %24, %81 : vector<16x32xf32>
    %c0_33 = arith.constant 0 : index
    %c0_34 = arith.constant 0 : index
    %c0_35 = arith.constant 0 : index
    %83 = vector.load %arg7[%c0_33, %c0_34, %c0_35] : memref<1x1x32xf32, #tpu.memory_space<vmem>>, vector<1x1x32xf32>
    %84 = vector.shape_cast %83 : vector<1x1x32xf32> to vector<1x32xf32>
    %c0_36 = arith.constant 0 : index
    %c0_37 = arith.constant 0 : index
    %c0_38 = arith.constant 0 : index
    %85 = vector.load %arg8[%c0_36, %c0_37, %c0_38] : memref<1x1x32xf32, #tpu.memory_space<vmem>>, vector<1x1x32xf32>
    %86 = vector.shape_cast %85 : vector<1x1x32xf32> to vector<1x32xf32>
    %cst_39 = arith.constant dense<0.000000e+00> : vector<16xf32>
    %87 = vector.multi_reduction <add>, %82, %cst_39 [1] : vector<16x32xf32> to vector<16xf32>
    %88 = vector.shape_cast %87 : vector<16xf32> to vector<16x1xf32>
    %cst_40 = arith.constant 3.200000e+01 : f32
    %89 = vector.broadcast %cst_40 : f32 to vector<16x1xf32>
    %90 = arith.divf %88, %89 : vector<16x1xf32>
    %91 = vector.broadcast %90 : vector<16x1xf32> to vector<16x32xf32>
    %92 = arith.subf %82, %91 : vector<16x32xf32>
    %93 = arith.mulf %92, %92 : vector<16x32xf32>
    %cst_41 = arith.constant dense<0.000000e+00> : vector<16xf32>
    %94 = vector.multi_reduction <add>, %93, %cst_41 [1] : vector<16x32xf32> to vector<16xf32>
    %95 = vector.shape_cast %94 : vector<16xf32> to vector<16x1xf32>
    %cst_42 = arith.constant 3.200000e+01 : f32
    %96 = vector.broadcast %cst_42 : f32 to vector<16x1xf32>
    %97 = arith.divf %95, %96 : vector<16x1xf32>
    %98 = vector.broadcast %90 : vector<16x1xf32> to vector<16x32xf32>
    %99 = arith.subf %82, %98 : vector<16x32xf32>
    %cst_43 = arith.constant 9.99999996E-13 : f32
    %100 = vector.broadcast %cst_43 : f32 to vector<16x1xf32>
    %101 = arith.addf %97, %100 : vector<16x1xf32>
    %102 = math.rsqrt %101 : vector<16x1xf32>
    %103 = vector.broadcast %102 : vector<16x1xf32> to vector<16x32xf32>
    %104 = arith.mulf %99, %103 : vector<16x32xf32>
    %105 = vector.broadcast %84 : vector<1x32xf32> to vector<16x32xf32>
    %106 = arith.mulf %104, %105 : vector<16x32xf32>
    %107 = vector.broadcast %86 : vector<1x32xf32> to vector<16x32xf32>
    %108 = arith.addf %106, %107 : vector<16x32xf32>
    %c0_44 = arith.constant 0 : index
    %c0_45 = arith.constant 0 : index
    %c0_46 = arith.constant 0 : index
    %109 = vector.load %arg9[%c0_44, %c0_45, %c0_46] : memref<1x32x64xf32, #tpu.memory_space<vmem>>, vector<1x32x64xf32>
    %110 = vector.shape_cast %109 : vector<1x32x64xf32> to vector<32x64xf32>
    %cst_47 = arith.constant dense<0.000000e+00> : vector<16x64xf32>
    %111 = tpu.matmul %108, %110, %cst_47 {dimension_numbers = #tpu.dot_dimension_numbers<[1], [0], [0], [1], [0, 0, 1, 1], [], []>} : vector<16x32xf32>, vector<32x64xf32>, vector<16x64xf32> -> vector<16x64xf32>
    %c0_48 = arith.constant 0 : index
    %c0_49 = arith.constant 0 : index
    %c0_50 = arith.constant 0 : index
    %112 = vector.load %arg10[%c0_48, %c0_49, %c0_50] : memref<1x1x64xf32, #tpu.memory_space<vmem>>, vector<1x1x64xf32>
    %113 = vector.shape_cast %112 : vector<1x1x64xf32> to vector<1x64xf32>
    %114 = vector.broadcast %113 : vector<1x64xf32> to vector<16x64xf32>
    %115 = arith.addf %111, %114 : vector<16x64xf32>
    %cst_51 = arith.constant 5.000000e-01 : f32
    %116 = vector.broadcast %cst_51 : f32 to vector<16x64xf32>
    %117 = arith.mulf %116, %115 : vector<16x64xf32>
    %cst_52 = arith.constant 4.471500e-02 : f32
    %118 = vector.broadcast %cst_52 : f32 to vector<16x64xf32>
    %119 = arith.mulf %118, %115 : vector<16x64xf32>
    %120 = arith.mulf %119, %115 : vector<16x64xf32>
    %121 = arith.mulf %120, %115 : vector<16x64xf32>
    %122 = arith.addf %115, %121 : vector<16x64xf32>
    %cst_53 = arith.constant 0.797884583 : f32
    %123 = vector.broadcast %cst_53 : f32 to vector<16x64xf32>
    %124 = arith.mulf %123, %122 : vector<16x64xf32>
    %125 = math.tanh %124 : vector<16x64xf32>
    %cst_54 = arith.constant 1.000000e+00 : f32
    %126 = vector.broadcast %cst_54 : f32 to vector<16x64xf32>
    %127 = arith.addf %126, %125 : vector<16x64xf32>
    %128 = arith.mulf %117, %127 : vector<16x64xf32>
    %c0_55 = arith.constant 0 : index
    %c0_56 = arith.constant 0 : index
    %c0_57 = arith.constant 0 : index
    %129 = vector.load %arg11[%c0_55, %c0_56, %c0_57] : memref<1x64x32xf32, #tpu.memory_space<vmem>>, vector<1x64x32xf32>
    %130 = vector.shape_cast %129 : vector<1x64x32xf32> to vector<64x32xf32>
    %cst_58 = arith.constant dense<0.000000e+00> : vector<16x32xf32>
    %131 = tpu.matmul %128, %130, %cst_58 {dimension_numbers = #tpu.dot_dimension_numbers<[1], [0], [0], [1], [0, 0, 1, 1], [], []>} : vector<16x64xf32>, vector<64x32xf32>, vector<16x32xf32> -> vector<16x32xf32>
    %c0_59 = arith.constant 0 : index
    %c0_60 = arith.constant 0 : index
    %c0_61 = arith.constant 0 : index
    %132 = vector.load %arg12[%c0_59, %c0_60, %c0_61] : memref<1x1x32xf32, #tpu.memory_space<vmem>>, vector<1x1x32xf32>
    %133 = vector.shape_cast %132 : vector<1x1x32xf32> to vector<1x32xf32>
    %134 = vector.broadcast %133 : vector<1x32xf32> to vector<16x32xf32>
    %135 = arith.addf %131, %134 : vector<16x32xf32>
    %136 = arith.addf %108, %135 : vector<16x32xf32>
    %c0_62 = arith.constant 0 : index
    %c0_63 = arith.constant 0 : index
    %c0_64 = arith.constant 0 : index
    %137 = vector.load %arg13[%c0_62, %c0_63, %c0_64] : memref<1x1x32xf32, #tpu.memory_space<vmem>>, vector<1x1x32xf32>
    %138 = vector.shape_cast %137 : vector<1x1x32xf32> to vector<1x32xf32>
    %c0_65 = arith.constant 0 : index
    %c0_66 = arith.constant 0 : index
    %c0_67 = arith.constant 0 : index
    %139 = vector.load %arg14[%c0_65, %c0_66, %c0_67] : memref<1x1x32xf32, #tpu.memory_space<vmem>>, vector<1x1x32xf32>
    %140 = vector.shape_cast %139 : vector<1x1x32xf32> to vector<1x32xf32>
    %cst_68 = arith.constant dense<0.000000e+00> : vector<16xf32>
    %141 = vector.multi_reduction <add>, %136, %cst_68 [1] : vector<16x32xf32> to vector<16xf32>
    %142 = vector.shape_cast %141 : vector<16xf32> to vector<16x1xf32>
    %cst_69 = arith.constant 3.200000e+01 : f32
    %143 = vector.broadcast %cst_69 : f32 to vector<16x1xf32>
    %144 = arith.divf %142, %143 : vector<16x1xf32>
    %145 = vector.broadcast %144 : vector<16x1xf32> to vector<16x32xf32>
    %146 = arith.subf %136, %145 : vector<16x32xf32>
    %147 = arith.mulf %146, %146 : vector<16x32xf32>
    %cst_70 = arith.constant dense<0.000000e+00> : vector<16xf32>
    %148 = vector.multi_reduction <add>, %147, %cst_70 [1] : vector<16x32xf32> to vector<16xf32>
    %149 = vector.shape_cast %148 : vector<16xf32> to vector<16x1xf32>
    %cst_71 = arith.constant 3.200000e+01 : f32
    %150 = vector.broadcast %cst_71 : f32 to vector<16x1xf32>
    %151 = arith.divf %149, %150 : vector<16x1xf32>
    %152 = vector.broadcast %144 : vector<16x1xf32> to vector<16x32xf32>
    %153 = arith.subf %136, %152 : vector<16x32xf32>
    %cst_72 = arith.constant 9.99999996E-13 : f32
    %154 = vector.broadcast %cst_72 : f32 to vector<16x1xf32>
    %155 = arith.addf %151, %154 : vector<16x1xf32>
    %156 = math.rsqrt %155 : vector<16x1xf32>
    %157 = vector.broadcast %156 : vector<16x1xf32> to vector<16x32xf32>
    %158 = arith.mulf %153, %157 : vector<16x32xf32>
    %159 = vector.broadcast %138 : vector<1x32xf32> to vector<16x32xf32>
    %160 = arith.mulf %158, %159 : vector<16x32xf32>
    %161 = vector.broadcast %140 : vector<1x32xf32> to vector<16x32xf32>
    %162 = arith.addf %160, %161 : vector<16x32xf32>
    %163 = vector.shape_cast %162 : vector<16x32xf32> to vector<2x8x32xf32>
    %164 = vector.extract_strided_slice %163 {offsets = [0, 0, 0], sizes = [2, 1, 32], strides = [1, 1, 1]} : vector<2x8x32xf32> to vector<2x1x32xf32>
    %165 = vector.shape_cast %164 : vector<2x1x32xf32> to vector<2x32xf32>
    %c0_73 = arith.constant 0 : index
    %c0_74 = arith.constant 0 : index
    %166 = vector.load %arg15[%c0_73, %c0_74] : memref<32x32xf32, #tpu.memory_space<vmem>>, vector<32x32xf32>
    %cst_75 = arith.constant dense<0.000000e+00> : vector<2x32xf32>
    %167 = tpu.matmul %165, %166, %cst_75 {dimension_numbers = #tpu.dot_dimension_numbers<[1], [0], [0], [1], [0, 0, 1, 1], [], []>} : vector<2x32xf32>, vector<32x32xf32>, vector<2x32xf32> -> vector<2x32xf32>
    %c0_76 = arith.constant 0 : index
    %c0_77 = arith.constant 0 : index
    %168 = vector.load %arg16[%c0_76, %c0_77] : memref<1x32xf32, #tpu.memory_space<vmem>>, vector<1x32xf32>
    %169 = vector.broadcast %168 : vector<1x32xf32> to vector<2x32xf32>
    %170 = arith.addf %167, %169 : vector<2x32xf32>
    %171 = math.tanh %170 : vector<2x32xf32>
    %c0_78 = arith.constant 0 : index
    %c0_79 = arith.constant 0 : index
    %172 = vector.load %arg17[%c0_78, %c0_79] : memref<32x5xf32, #tpu.memory_space<vmem>>, vector<32x5xf32>
    %cst_80 = arith.constant dense<0.000000e+00> : vector<2x5xf32>
    %173 = tpu.matmul %171, %172, %cst_80 {dimension_numbers = #tpu.dot_dimension_numbers<[1], [0], [0], [1], [0, 0, 1, 1], [], []>} : vector<2x32xf32>, vector<32x5xf32>, vector<2x5xf32> -> vector<2x5xf32>
    %c0_81 = arith.constant 0 : index
    %c0_82 = arith.constant 0 : index
    %174 = vector.load %arg18[%c0_81, %c0_82] : memref<1x5xf32, #tpu.memory_space<vmem>>, vector<1x5xf32>
    %175 = vector.broadcast %174 : vector<1x5xf32> to vector<2x5xf32>
    %176 = arith.addf %173, %175 : vector<2x5xf32>
    %c0_83 = arith.constant 0 : index
    %c0_84 = arith.constant 0 : index
    %177 = vector.load %arg20[%c0_83, %c0_84] : memref<2x32xf32, #tpu.memory_space<vmem>>, vector<2x32xf32>
    tpu.vector_store %arg20[%c0_83, %c0_84], %171 {strides = array<i32>} : memref<2x32xf32, #tpu.memory_space<vmem>>, vector<2x32xf32>,
    %c0_85 = arith.constant 0 : index
    %c0_86 = arith.constant 0 : index
    %178 = vector.load %arg19[%c0_85, %c0_86] : memref<2x5xf32, #tpu.memory_space<vmem>>, vector<2x5xf32>
    tpu.vector_store %arg19[%c0_85, %c0_86], %176 {strides = array<i32>} : memref<2x5xf32, #tpu.memory_space<vmem>>, vector<2x5xf32>,
    return
  }
}

</mosaic_0001>

<llo_original>
// kernel: bert_spc_cl_forward.1
$region0: #{bert_spc_cl_forward.1}
  #allocation0 [shape = 'u32[]', space=smem, size = 0x4, offset = 0x4, fixed_abs, tag = 'smem constant byte address 0x4 - core index']
  #allocation1 [shape = 'u32[144,128]{1,0:T(1,128)}', space=vmem, size = 0x12000, scoped, tag = 'internal scratch']
  %s0 = inlined_call_operand.vmem [shape: f32[16,32], index: 0, kind: input, shape index: {}]
  %s1 = inlined_call_operand.vmem [shape: f32[1,32], index: 1, kind: input, shape index: {}]
  %s2 = inlined_call_operand.vmem [shape: f32[1,32], index: 2, kind: input, shape index: {}]
  %s3 = inlined_call_operand.vmem [shape: f32[1,32,96], index: 3, kind: input, shape index: {}]
  %s4 = inlined_call_operand.vmem [shape: f32[1,1,96], index: 4, kind: input, shape index: {}]
  %s5 = inlined_call_operand.vmem [shape: f32[1,32,32], index: 5, kind: input, shape index: {}]
  %s6 = inlined_call_operand.vmem [shape: f32[1,1,32], index: 6, kind: input, shape index: {}]
  %s7 = inlined_call_operand.vmem [shape: f32[1,1,32], index: 7, kind: input, shape index: {}]
  %s8 = inlined_call_operand.vmem [shape: f32[1,1,32], index: 8, kind: input, shape index: {}]
  %s9 = inlined_call_operand.vmem [shape: f32[1,32,64], index: 9, kind: input, shape index: {}]
  %s10 = inlined_call_operand.vmem [shape: f32[1,1,64], index: 10, kind: input, shape index: {}]
  %s11 = inlined_call_operand.vmem [shape: f32[1,64,32], index: 11, kind: input, shape index: {}]
  %s12 = inlined_call_operand.vmem [shape: f32[1,1,32], index: 12, kind: input, shape index: {}]
  %s13 = inlined_call_operand.vmem [shape: f32[1,1,32], index: 13, kind: input, shape index: {}]
  %s14 = inlined_call_operand.vmem [shape: f32[1,1,32], index: 14, kind: input, shape index: {}]
  %s15 = inlined_call_operand.vmem [shape: f32[32,32], index: 15, kind: input, shape index: {}]
  %s16 = inlined_call_operand.vmem [shape: f32[1,32], index: 16, kind: input, shape index: {}]
  %s17 = inlined_call_operand.vmem [shape: f32[32,5], index: 17, kind: input, shape index: {}]
  %s18 = inlined_call_operand.vmem [shape: f32[1,5], index: 18, kind: input, shape index: {}]
  %s19 = inlined_call_operand.vmem [shape: f32[2,5], index: 19, kind: output, shape index: {0}]
  %s20 = inlined_call_operand.hbm [shape: f32[2,32], index: 20, kind: output, shape index: {1}]
  %21 = xla_tuple %s19, %s20
  %s22 = sld [smem:[#allocation0]]
  $region94: #{bert_spc_cl_forward.1} parent=0
    _
  %s24 = ssub.s32 1, %s22
  %s25 = scalar_select 0, %s24, %s22
  $region1: #{bert_spc_cl_forward.1} parent=0
    #allocation2 [shape = 'u8[1024]{0}', space=vmem, size = 0x400, scoped, tag = 'output window, operand 1, single buffered']
    #allocation3 [shape = 's32[1]{0}', space=sflag, size = 0x4, scoped, tag = 'scoped memory for bert_spc_cl_forward.1']
    %26 = vsyncpa [#allocation3], 0
    // Predicated region
    $region2: #{bert_spc_cl_forward.1} parent=1 // pred_check
      _
    $region3: #{bert_spc_cl_forward.1} parent=1 // pred_check_branch
      %28 = sbr.rel (0) target = $region5
    $region4: #{bert_spc_cl_forward.1} parent=1 // pred_region
      _
    $region5: #{bert_spc_cl_forward.1} parent=1 // pred_fallthru
      _
    // Predicated region
    $region6: #{bert_spc_cl_forward.1} parent=1 // pred_check
      _
    $region7: #{bert_spc_cl_forward.1} parent=1 // pred_check_branch
      %30 = sbr.rel (0) target = $region9
    $region8: #{bert_spc_cl_forward.1} parent=1 // pred_region
      _
    $region9: #{bert_spc_cl_forward.1} parent=1 // pred_fallthru
      _
    // Predicated region
    $region10: #{bert_spc_cl_forward.1} parent=1 // pred_check
      _
    $region11: #{bert_spc_cl_forward.1} parent=1 // pred_check_branch
      %32 = sbr.rel (0) target = $region13
    $region12: #{bert_spc_cl_forward.1} parent=1 // pred_region
      _
    $region13: #{bert_spc_cl_forward.1} parent=1 // pred_fallthru
      _
    // Predicated region
    $region14: #{bert_spc_cl_forward.1} parent=1 // pred_check
      _
    $region15: #{bert_spc_cl_forward.1} parent=1 // pred_check_branch
      %34 = sbr.rel (0) target = $region17
    $region16: #{bert_spc_cl_forward.1} parent=1 // pred_region
      _
    $region17: #{bert_spc_cl_forward.1} parent=1 // pred_fallthru
      _
    // Predicated region
    $region18: #{bert_spc_cl_forward.1} parent=1 // pred_check
      _
    $region19: #{bert_spc_cl_forward.1} parent=1 // pred_check_branch
      %36 = sbr.rel (0) target = $region21
    $region20: #{bert_spc_cl_forward.1} parent=1 // pred_region
      _
    $region21: #{bert_spc_cl_forward.1} parent=1 // pred_fallthru
      _
    // Predicated region
    $region22: #{bert_spc_cl_forward.1} parent=1 // pred_check
      _
    $region23: #{bert_spc_cl_forward.1} parent=1 // pred_check_branch
      %38 = sbr.rel (0) target = $region25
    $region24: #{bert_spc_cl_forward.1} parent=1 // pred_region
      _
    $region25: #{bert_spc_cl_forward.1} parent=1 // pred_fallthru
      _
    // Predicated region
    $region26: #{bert_spc_cl_forward.1} parent=1 // pred_check
      _
    $region27: #{bert_spc_cl_forward.1} parent=1 // pred_check_branch
      %40 = sbr.rel (0) target = $region29
    $region28: #{bert_spc_cl_forward.1} parent=1 // pred_region
      _
    $region29: #{bert_spc_cl_forward.1} parent=1 // pred_fallthru
      _
    // Predicated region
    $region30: #{bert_spc_cl_forward.1} parent=1 // pred_check
      _
    $region31: #{bert_spc_cl_forward.1} parent=1 // pred_check_branch
      %42 = sbr.rel (0) target = $region33
    $region32: #{bert_spc_cl_forward.1} parent=1 // pred_region
      _
    $region33: #{bert_spc_cl_forward.1} parent=1 // pred_fallthru
      _
    // Predicated region
    $region34: #{bert_spc_cl_forward.1} parent=1 // pred_check
      _
    $region35: #{bert_spc_cl_forward.1} parent=1 // pred_check_branch
      %44 = sbr.rel (0) target = $region37
    $region36: #{bert_spc_cl_forward.1} parent=1 // pred_region
      _
    $region37: #{bert_spc_cl_forward.1} parent=1 // pred_fallthru
      _
    // Predicated region
    $region38: #{bert_spc_cl_forward.1} parent=1 // pred_check
      _
    $region39: #{bert_spc_cl_forward.1} parent=1 // pred_check_branch
      %46 = sbr.rel (0) target = $region41
    $region40: #{bert_spc_cl_forward.1} parent=1 // pred_region
      _
    $region41: #{bert_spc_cl_forward.1} parent=1 // pred_fallthru
      _
    // Predicated region
    $region42: #{bert_spc_cl_forward.1} parent=1 // pred_check
      _
    $region43: #{bert_spc_cl_forward.1} parent=1 // pred_check_branch
      %48 = sbr.rel (0) target = $region45
    $region44: #{bert_spc_cl_forward.1} parent=1 // pred_region
      _
    $region45: #{bert_spc_cl_forward.1} parent=1 // pred_fallthru
      _
    // Predicated region
    $region46: #{bert_spc_cl_forward.1} parent=1 // pred_check
      _
    $region47: #{bert_spc_cl_forward.1} parent=1 // pred_check_branch
      %50 = sbr.rel (0) target = $region49
    $region48: #{bert_spc_cl_forward.1} parent=1 // pred_region
      _
    $region49: #{bert_spc_cl_forward.1} parent=1 // pred_fallthru
      _
    // Predicated region
    $region50: #{bert_spc_cl_forward.1} parent=1 // pred_check
      _
    $region51: #{bert_spc_cl_forward.1} parent=1 // pred_check_branch
      %52 = sbr.rel (0) target = $region53
    $region52: #{bert_spc_cl_forward.1} parent=1 // pred_region
      _
    $region53: #{bert_spc_cl_forward.1} parent=1 // pred_fallthru
      _
    // Predicated region
    $region54: #{bert_spc_cl_forward.1} parent=1 // pred_check
      _
    $region55: #{bert_spc_cl_forward.1} parent=1 // pred_check_branch
      %54 = sbr.rel (0) target = $region57
    $region56: #{bert_spc_cl_forward.1} parent=1 // pred_region
      _
    $region57: #{bert_spc_cl_forward.1} parent=1 // pred_fallthru
      _
    // Predicated region
    $region58: #{bert_spc_cl_forward.1} parent=1 // pred_check
      _
    $region59: #{bert_spc_cl_forward.1} parent=1 // pred_check_branch
      %56 = sbr.rel (0) target = $region61
    $region60: #{bert_spc_cl_forward.1} parent=1 // pred_region
      _
    $region61: #{bert_spc_cl_forward.1} parent=1 // pred_fallthru
      _
    // Predicated region
    $region62: #{bert_spc_cl_forward.1} parent=1 // pred_check
      _
    $region63: #{bert_spc_cl_forward.1} parent=1 // pred_check_branch
      %58 = sbr.rel (0) target = $region65
    $region64: #{bert_spc_cl_forward.1} parent=1 // pred_region
      _
    $region65: #{bert_spc_cl_forward.1} parent=1 // pred_fallthru
      _
    // Predicated region
    $region66: #{bert_spc_cl_forward.1} parent=1 // pred_check
      _
    $region67: #{bert_spc_cl_forward.1} parent=1 // pred_check_branch
      %60 = sbr.rel (0) target = $region69
    $region68: #{bert_spc_cl_forward.1} parent=1 // pred_region
      _
    $region69: #{bert_spc_cl_forward.1} parent=1 // pred_fallthru
      _
    // Predicated region
    $region70: #{bert_spc_cl_forward.1} parent=1 // pred_check
      _
    $region71: #{bert_spc_cl_forward.1} parent=1 // pred_check_branch
      %62 = sbr.rel (0) target = $region73
    $region72: #{bert_spc_cl_forward.1} parent=1 // pred_region
      _
    $region73: #{bert_spc_cl_forward.1} parent=1 // pred_fallthru
      _
    // Predicated region
    $region74: #{bert_spc_cl_forward.1} parent=1 // pred_check
      _
    $region75: #{bert_spc_cl_forward.1} parent=1 // pred_check_branch
      %64 = sbr.rel (0) target = $region77
    $region76: #{bert_spc_cl_forward.1} parent=1 // pred_region
      _
    $region77: #{bert_spc_cl_forward.1} parent=1 // pred_fallthru
      _
    %v65 = vld [vmem:[%s0] sm:$0xff]
    %v66 = vld [vmem:[%s0 + $0x8] sm:$0xff]
    %v67 = vld [vmem:[%s1] sm:$0x1]
    %v68 = vld [vmem:[%s2] sm:$0x1]
    %vm69 = vcmask 261120
    %v70 = vsel %vm69, %v65, 0.0
    %71 = vadd.xlane.f32.xlu0 %v70
    %v72 = vpop.xlane.xlu0 %71
    %v73 = vsel %vm69, %v66, 0.0
    %74 = vadd.xlane.f32.xlu0 %v73
    %v75 = vpop.xlane.xlu0 %74
    %v76 = vrcp.pop 32.0
    %v77 = vmul.f32 %v72, %v76
    %v78 = vmul.f32 %v75, %v76
    %v79 = vsub.f32 %v65, %v77
    %v80 = vsub.f32 %v66, %v78
    %v81 = vmul.f32 %v79, %v79
    %v82 = vmul.f32 %v80, %v80
    %v83 = vsel %vm69, %v81, 0.0
    %84 = vadd.xlane.f32.xlu0 %v83
    %v85 = vpop.xlane.xlu0 %84
    %v86 = vsel %vm69, %v82, 0.0
    %87 = vadd.xlane.f32.xlu0 %v86
    %v88 = vpop.xlane.xlu0 %87
    %v89 = vmul.f32 %v85, %v76
    %v90 = vmul.f32 %v88, %v76
    %v91 = vadd.f32 %v89, 1e-12
    %v92 = vadd.f32 %v90, 1e-12
    %v93 = vrsqrt.pop %v91
    %v94 = vrsqrt.pop %v92
    %v95 = vmul.f32 %v79, %v93
    %v96 = vmul.f32 %v80, %v94
    %v98 = vlaneseq
    %v99 = vshrl.u32 %v98, 7
    %v100 = vsub.s32 0, %v99
    %v101 = vrot.slane %v67, %v100
    %v103 = vmul.f32 %v95, %v101
    %v104 = vmul.f32 %v96, %v101
    %v106 = vlaneseq
    %v107 = vshrl.u32 %v106, 7
    %v108 = vsub.s32 0, %v107
    %v109 = vrot.slane %v68, %v108
    %v111 = vadd.f32 %v103, %v109
    %v112 = vadd.f32 %v104, %v109
    %v113 = vld [vmem:[%s3] sm:$0xff]
    %v114 = vld [vmem:[%s3 + $0x8] sm:$0xff]
    %v115 = vld [vmem:[%s3 + $0x10] sm:$0xff]
    %v116 = vld [vmem:[%s3 + $0x18] sm:$0xff]
    %v117 = vld [vmem:[%s4] sm:$0x1]
    %v119 = vlaneseq
    %v120 = vshrl.u32 %v119, 7
    %v121 = vsub.s32 0, %v120
    %v122 = vrot.slane %v117, %v121
    %v125 = vsel %vm69, %v111, 0
    %v128 = vsel %vm69, %v112, 0
    %130 = vmatprep.subr.mxu0 0.0
    %131 = vmatpush1.msra.mxu0 0.0
    %132 = vmatprep.subr.mxu0 0.0
    %133 = vmatpush1.msra.mxu0 0.0
    %134 = vmatprep.subr.mxu0 0.0
    %135 = vmatpush1.msra.mxu0 0.0
    %136 = vmatprep.subr.mxu0 0.0
    %137 = vmatpush1.msra.mxu0 0.0
    %138 = vmatprep.subr.mxu0 0.0
    %139 = vmatpush1.msra.mxu0 0.0
    %140 = vmatprep.subr.mxu0 0.0
    %141 = vmatpush1.msra.mxu0 0.0
    %142 = vmatprep.subr.mxu0 0.0
    %143 = vmatpush1.msra.mxu0 0.0
    %144 = vmatprep.subr.mxu0 0.0
    %145 = vmatpush1.msra.mxu0 0.0
    %146 = vmatprep.subr.mxu0 0.0
    %147 = vmatpush1.msra.mxu0 0.0
    %148 = vmatprep.subr.mxu0 0.0
    %149 = vmatpush1.msra.mxu0 0.0
    %150 = vmatprep.subr.mxu0 0.0
    %151 = vmatpush1.msra.mxu0 0.0
    %152 = vmatprep.subr.mxu0 0.0
    %153 = vmatpush1.msra.mxu0 0.0
    %154 = vmatprep.subr.mxu0 0.0
    %155 = vmatpush1.msra.mxu0 %v116
    %156 = vmatprep.subr.mxu0 0.0
    %157 = vmatpush1.msra.mxu0 %v115
    %158 = vmatprep.subr.mxu0 0.0
    %159 = vmatpush1.msra.mxu0 %v114
    %160 = vmatprep.subr.mxu0 0.0
    %161 = vmatpush1.msra.mxu0 %v113
    %162 = vmatprep.subr.mxu0 0.0
    %163 = vmatpush2.msra.mxu0 0.0
    %164 = vmatprep.subr.mxu0 0.0
    %165 = vmatpush2.msra.mxu0 0.0
    %166 = vmatprep.subr.mxu0 0.0
    %167 = vmatpush2.msra.mxu0 0.0
    %168 = vmatprep.subr.mxu0 0.0
    %169 = vmatpush2.msra.mxu0 0.0
    %170 = vmatprep.subr.mxu0 0.0
    %171 = vmatpush2.msra.mxu0 0.0
    %172 = vmatprep.subr.mxu0 0.0
    %173 = vmatpush2.msra.mxu0 0.0
    %174 = vmatprep.subr.mxu0 0.0
    %175 = vmatpush2.msra.mxu0 0.0
    %176 = vmatprep.subr.mxu0 0.0
    %177 = vmatpush2.msra.mxu0 0.0
    %178 = vmatprep.subr.mxu0 0.0
    %179 = vmatpush2.msra.mxu0 0.0
    %180 = vmatprep.subr.mxu0 0.0
    %181 = vmatpush2.msra.mxu0 0.0
    %182 = vmatprep.subr.mxu0 0.0
    %183 = vmatpush2.msra.mxu0 0.0
    %184 = vmatprep.subr.mxu0 0.0
    %185 = vmatpush2.msra.mxu0 0.0
    %186 = vmatprep.subr.mxu0 0.0
    %187 = vmatpush2.msra.mxu0 0.0
    %188 = vmatprep.subr.mxu0 0.0
    %189 = vmatpush2.msra.mxu0 0.0
    %190 = vmatprep.subr.mxu0 0.0
    %191 = vmatpush2.msra.mxu0 0.0
    %192 = vmatprep.subr.mxu0 0.0
    %193 = vmatpush2.msra.mxu0 0.0
    %194 = vmatprep.mubr.f32.mxu0 0.0
    %195 = vmatmul.mubr.f32.gmra.mxu0 %v125
    %v196 = vpop.f32.mrf.mxu0
    %v197 = vadd.f32 %v122, %v196
    %v198 = vpop.f32.mrf.mxu0
    %199 = vmatprep.mubr.f32.mxu0 0.0
    %200 = vmatmul.mubr.f32.gmra.mxu0 %v128
    %v201 = vpop.f32.mrf.mxu0
    %v202 = vadd.f32 %v122, %v201
    %v203 = vpop.f32.mrf.mxu0
    %204 = vdwg.mxu0
    %v205 = vmul.f32 %v197, 0.25
    %v206 = vmul.f32 %v202, 0.25
    %208 = vrot.lane.b32.xlu0 %v197, 96
    %v209 = vpop.permute.xlu0 %208
    %vm210 = vcmask 130048
    %v212 = vsel %vm210, %v205, 0
    %v214 = vsel %vm210, %v209, 0
    %216 = vmatprep.subr.mxu0 0.0
    %217 = vmatpush1.xpose.msra.mxu0 0.0
    %218 = vmatprep.subr.mxu0 0.0
    %219 = vmatpush1.xpose.msra.mxu0 0.0
    %220 = vmatprep.subr.mxu0 0.0
    %221 = vmatpush1.xpose.msra.mxu0 0.0
    %222 = vmatprep.subr.mxu0 0.0
    %223 = vmatpush1.xpose.msra.mxu0 0.0
    %224 = vmatprep.subr.mxu0 0.0
    %225 = vmatpush1.xpose.msra.mxu0 0.0
    %226 = vmatprep.subr.mxu0 0.0
    %227 = vmatpush1.xpose.msra.mxu0 0.0
    %228 = vmatprep.subr.mxu0 0.0
    %229 = vmatpush1.xpose.msra.mxu0 0.0
    %230 = vmatprep.subr.mxu0 0.0
    %231 = vmatpush1.xpose.msra.mxu0 0.0
    %232 = vmatprep.subr.mxu0 0.0
    %233 = vmatpush1.xpose.msra.mxu0 0.0
    %234 = vmatprep.subr.mxu0 0.0
    %235 = vmatpush1.xpose.msra.mxu0 0.0
    %236 = vmatprep.subr.mxu0 0.0
    %237 = vmatpush1.xpose.msra.mxu0 0.0
    %238 = vmatprep.subr.mxu0 0.0
    %239 = vmatpush1.xpose.msra.mxu0 0.0
    %240 = vmatprep.subr.mxu0 0.0
    %241 = vmatpush1.xpose.msra.mxu0 0.0
    %242 = vmatprep.subr.mxu0 0.0
    %243 = vmatpush1.xpose.msra.mxu0 0.0
    %244 = vmatprep.subr.mxu0 0.0
    %245 = vmatpush1.xpose.msra.mxu0 0.0
    %246 = vmatprep.subr.mxu0 0.0
    %247 = vmatpush1.xpose.msra.mxu0 %v214
    %248 = vmatprep.subr.mxu0 0.0
    %249 = vmatpush2.xpose.msra.mxu0 0.0
    %250 = vmatprep.subr.mxu0 0.0
    %251 = vmatpush2.xpose.msra.mxu0 0.0
    %252 = vmatprep.subr.mxu0 0.0
    %253 = vmatpush2.xpose.msra.mxu0 0.0
    %254 = vmatprep.subr.mxu0 0.0
    %255 = vmatpush2.xpose.msra.mxu0 0.0
    %256 = vmatprep.subr.mxu0 0.0
    %257 = vmatpush2.xpose.msra.mxu0 0.0
    %258 = vmatprep.subr.mxu0 0.0
    %259 = vmatpush2.xpose.msra.mxu0 0.0
    %260 = vmatprep.subr.mxu0 0.0
    %261 = vmatpush2.xpose.msra.mxu0 0.0
    %262 = vmatprep.subr.mxu0 0.0
    %263 = vmatpush2.xpose.msra.mxu0 0.0
    %264 = vmatprep.subr.mxu0 0.0
    %265 = vmatpush2.xpose.msra.mxu0 0.0
    %266 = vmatprep.subr.mxu0 0.0
    %267 = vmatpush2.xpose.msra.mxu0 0.0
    %268 = vmatprep.subr.mxu0 0.0
    %269 = vmatpush2.xpose.msra.mxu0 0.0
    %270 = vmatprep.subr.mxu0 0.0
    %271 = vmatpush2.xpose.msra.mxu0 0.0
    %272 = vmatprep.subr.mxu0 0.0
    %273 = vmatpush2.xpose.msra.mxu0 0.0
    %274 = vmatprep.subr.mxu0 0.0
    %275 = vmatpush2.xpose.msra.mxu0 0.0
    %276 = vmatprep.subr.mxu0 0.0
    %277 = vmatpush2.xpose.msra.mxu0 0.0
    %278 = vmatprep.subr.mxu0 0.0
    %279 = vmatpush2.xpose.msra.mxu0 0.0
    %280 = vmatprep.mubr.f32.mxu0 0.0
    %281 = vmatmul.mubr.f32.gmra.mxu0 %v212
    %v282 = vpop.f32.mrf.mxu0
    %v283 = vadd.f32 0.0, %v282
    %v284 = vpop.f32.mrf.mxu0
    %285 = vdwg.mxu0
    %287 = vrot.lane.b32.xlu0 %v202, 96
    %v288 = vpop.permute.xlu0 %287
    %v290 = vsel %vm210, %v206, 0
    %v292 = vsel %vm210, %v288, 0
    %294 = vmatprep.subr.mxu0 0.0
    %295 = vmatpush1.xpose.msra.mxu0 0.0
    %296 = vmatprep.subr.mxu0 0.0
    %297 = vmatpush1.xpose.msra.mxu0 0.0
    %298 = vmatprep.subr.mxu0 0.0
    %299 = vmatpush1.xpose.msra.mxu0 0.0
    %300 = vmatprep.subr.mxu0 0.0
    %301 = vmatpush1.xpose.msra.mxu0 0.0
    %302 = vmatprep.subr.mxu0 0.0
    %303 = vmatpush1.xpose.msra.mxu0 0.0
    %304 = vmatprep.subr.mxu0 0.0
    %305 = vmatpush1.xpose.msra.mxu0 0.0
    %306 = vmatprep.subr.mxu0 0.0
    %307 = vmatpush1.xpose.msra.mxu0 0.0
    %308 = vmatprep.subr.mxu0 0.0
    %309 = vmatpush1.xpose.msra.mxu0 0.0
    %310 = vmatprep.subr.mxu0 0.0
    %311 = vmatpush1.xpose.msra.mxu0 0.0
    %312 = vmatprep.subr.mxu0 0.0
    %313 = vmatpush1.xpose.msra.mxu0 0.0
    %314 = vmatprep.subr.mxu0 0.0
    %315 = vmatpush1.xpose.msra.mxu0 0.0
    %316 = vmatprep.subr.mxu0 0.0
    %317 = vmatpush1.xpose.msra.mxu0 0.0
    %318 = vmatprep.subr.mxu0 0.0
    %319 = vmatpush1.xpose.msra.mxu0 0.0
    %320 = vmatprep.subr.mxu0 0.0
    %321 = vmatpush1.xpose.msra.mxu0 0.0
    %322 = vmatprep.subr.mxu0 0.0
    %323 = vmatpush1.xpose.msra.mxu0 0.0
    %324 = vmatprep.subr.mxu0 0.0
    %325 = vmatpush1.xpose.msra.mxu0 %v292
    %326 = vmatprep.subr.mxu0 0.0
    %327 = vmatpush2.xpose.msra.mxu0 0.0
    %328 = vmatprep.subr.mxu0 0.0
    %329 = vmatpush2.xpose.msra.mxu0 0.0
    %330 = vmatprep.subr.mxu0 0.0
    %331 = vmatpush2.xpose.msra.mxu0 0.0
    %332 = vmatprep.subr.mxu0 0.0
    %333 = vmatpush2.xpose.msra.mxu0 0.0
    %334 = vmatprep.subr.mxu0 0.0
    %335 = vmatpush2.xpose.msra.mxu0 0.0
    %336 = vmatprep.subr.mxu0 0.0
    %337 = vmatpush2.xpose.msra.mxu0 0.0
    %338 = vmatprep.subr.mxu0 0.0
    %339 = vmatpush2.xpose.msra.mxu0 0.0
    %340 = vmatprep.subr.mxu0 0.0
    %341 = vmatpush2.xpose.msra.mxu0 0.0
    %342 = vmatprep.subr.mxu0 0.0
    %343 = vmatpush2.xpose.msra.mxu0 0.0
    %344 = vmatprep.subr.mxu0 0.0
    %345 = vmatpush2.xpose.msra.mxu0 0.0
    %346 = vmatprep.subr.mxu0 0.0
    %347 = vmatpush2.xpose.msra.mxu0 0.0
    %348 = vmatprep.subr.mxu0 0.0
    %349 = vmatpush2.xpose.msra.mxu0 0.0
    %350 = vmatprep.subr.mxu0 0.0
    %351 = vmatpush2.xpose.msra.mxu0 0.0
    %352 = vmatprep.subr.mxu0 0.0
    %353 = vmatpush2.xpose.msra.mxu0 0.0
    %354 = vmatprep.subr.mxu0 0.0
    %355 = vmatpush2.xpose.msra.mxu0 0.0
    %356 = vmatprep.subr.mxu0 0.0
    %357 = vmatpush2.xpose.msra.mxu0 0.0
    %358 = vmatprep.mubr.f32.mxu0 0.0
    %359 = vmatmul.mubr.f32.gmra.mxu0 %v290
    %v360 = vpop.f32.mrf.mxu0
    %v361 = vadd.f32 0.0, %v360
    %v362 = vpop.f32.mrf.mxu0
    %363 = vdwg.mxu0
    %vm364 = vcmask 64512
    %v365 = vsel %vm364, %v283, -inf
    %366 = vmax.xlane.f32.xlu0 %v365
    %v367 = vpop.xlane.xlu0 %366
    %v368 = vsel %vm364, %v361, -inf
    %369 = vmax.xlane.f32.xlu0 %v368
    %v370 = vpop.xlane.xlu0 %369
    %v371 = vsub.f32 %v283, %v367
    %v372 = vsub.f32 %v361, %v370
    %v373 = vmul.f32 %v371, 1.442695
    %v374 = vpow.pop %v373
    %v375 = vmul.f32 %v372, 1.442695
    %v376 = vpow.pop %v375
    %v377 = vsel %vm364, %v374, 0.0
    %378 = vadd.xlane.f32.xlu0 %v377
    %v379 = vpop.xlane.xlu0 %378
    %v380 = vsel %vm364, %v376, 0.0
    %381 = vadd.xlane.f32.xlu0 %v380
    %v382 = vpop.xlane.xlu0 %381
    %v383 = vrcp.pop %v379
    %v384 = vrcp.pop %v382
    %v385 = vmul.f32 %v374, %v383
    %v386 = vmul.f32 %v376, %v384
    %387 = vrot.lane.b32.xlu0 %v197, 64
    %v388 = vpop.permute.xlu0 %387
    %v391 = vsel %vm364, %v385, 0
    %393 = vmatprep.subr.mxu0 0.0
    %394 = vmatpush1.msra.mxu0 0.0
    %395 = vmatprep.subr.mxu0 0.0
    %396 = vmatpush1.msra.mxu0 0.0
    %397 = vmatprep.subr.mxu0 0.0
    %398 = vmatpush1.msra.mxu0 0.0
    %399 = vmatprep.subr.mxu0 0.0
    %400 = vmatpush1.msra.mxu0 0.0
    %401 = vmatprep.subr.mxu0 0.0
    %402 = vmatpush1.msra.mxu0 0.0
    %403 = vmatprep.subr.mxu0 0.0
    %404 = vmatpush1.msra.mxu0 0.0
    %405 = vmatprep.subr.mxu0 0.0
    %406 = vmatpush1.msra.mxu0 0.0
    %407 = vmatprep.subr.mxu0 0.0
    %408 = vmatpush1.msra.mxu0 0.0
    %409 = vmatprep.subr.mxu0 0.0
    %410 = vmatpush1.msra.mxu0 0.0
    %411 = vmatprep.subr.mxu0 0.0
    %412 = vmatpush1.msra.mxu0 0.0
    %413 = vmatprep.subr.mxu0 0.0
    %414 = vmatpush1.msra.mxu0 0.0
    %415 = vmatprep.subr.mxu0 0.0
    %416 = vmatpush1.msra.mxu0 0.0
    %417 = vmatprep.subr.mxu0 0.0
    %418 = vmatpush1.msra.mxu0 0.0
    %419 = vmatprep.subr.mxu0 0.0
    %420 = vmatpush1.msra.mxu0 0.0
    %421 = vmatprep.subr.mxu0 0.0
    %422 = vmatpush1.msra.mxu0 0.0
    %423 = vmatprep.subr.mxu0 0.0
    %424 = vmatpush1.msra.mxu0 %v388
    %425 = vmatprep.subr.mxu0 0.0
    %426 = vmatpush2.msra.mxu0 0.0
    %427 = vmatprep.subr.mxu0 0.0
    %428 = vmatpush2.msra.mxu0 0.0
    %429 = vmatprep.subr.mxu0 0.0
    %430 = vmatpush2.msra.mxu0 0.0
    %431 = vmatprep.subr.mxu0 0.0
    %432 = vmatpush2.msra.mxu0 0.0
    %433 = vmatprep.subr.mxu0 0.0
    %434 = vmatpush2.msra.mxu0 0.0
    %435 = vmatprep.subr.mxu0 0.0
    %436 = vmatpush2.msra.mxu0 0.0
    %437 = vmatprep.subr.mxu0 0.0
    %438 = vmatpush2.msra.mxu0 0.0
    %439 = vmatprep.subr.mxu0 0.0
    %440 = vmatpush2.msra.mxu0 0.0
    %441 = vmatprep.subr.mxu0 0.0
    %442 = vmatpush2.msra.mxu0 0.0
    %443 = vmatprep.subr.mxu0 0.0
    %444 = vmatpush2.msra.mxu0 0.0
    %445 = vmatprep.subr.mxu0 0.0
    %446 = vmatpush2.msra.mxu0 0.0
    %447 = vmatprep.subr.mxu0 0.0
    %448 = vmatpush2.msra.mxu0 0.0
    %449 = vmatprep.subr.mxu0 0.0
    %450 = vmatpush2.msra.mxu0 0.0
    %451 = vmatprep.subr.mxu0 0.0
    %452 = vmatpush2.msra.mxu0 0.0
    %453 = vmatprep.subr.mxu0 0.0
    %454 = vmatpush2.msra.mxu0 0.0
    %455 = vmatprep.subr.mxu0 0.0
    %456 = vmatpush2.msra.mxu0 0.0
    %457 = vmatprep.mubr.f32.mxu0 0.0
    %458 = vmatmul.mubr.f32.gmra.mxu0 %v391
    %v459 = vpop.f32.mrf.mxu0
    %v460 = vadd.f32 0.0, %v459
    %v461 = vpop.f32.mrf.mxu0
    %462 = vdwg.mxu0
    %463 = vrot.lane.b32.xlu0 %v202, 64
    %v464 = vpop.permute.xlu0 %463
    %v467 = vsel %vm364, %v386, 0
    %469 = vmatprep.subr.mxu0 0.0
    %470 = vmatpush1.msra.mxu0 0.0
    %471 = vmatprep.subr.mxu0 0.0
    %472 = vmatpush1.msra.mxu0 0.0
    %473 = vmatprep.subr.mxu0 0.0
    %474 = vmatpush1.msra.mxu0 0.0
    %475 = vmatprep.subr.mxu0 0.0
    %476 = vmatpush1.msra.mxu0 0.0
    %477 = vmatprep.subr.mxu0 0.0
    %478 = vmatpush1.msra.mxu0 0.0
    %479 = vmatprep.subr.mxu0 0.0
    %480 = vmatpush1.msra.mxu0 0.0
    %481 = vmatprep.subr.mxu0 0.0
    %482 = vmatpush1.msra.mxu0 0.0
    %483 = vmatprep.subr.mxu0 0.0
    %484 = vmatpush1.msra.mxu0 0.0
    %485 = vmatprep.subr.mxu0 0.0
    %486 = vmatpush1.msra.mxu0 0.0
    %487 = vmatprep.subr.mxu0 0.0
    %488 = vmatpush1.msra.mxu0 0.0
    %489 = vmatprep.subr.mxu0 0.0
    %490 = vmatpush1.msra.mxu0 0.0
    %491 = vmatprep.subr.mxu0 0.0
    %492 = vmatpush1.msra.mxu0 0.0
    %493 = vmatprep.subr.mxu0 0.0
    %494 = vmatpush1.msra.mxu0 0.0
    %495 = vmatprep.subr.mxu0 0.0
    %496 = vmatpush1.msra.mxu0 0.0
    %497 = vmatprep.subr.mxu0 0.0
    %498 = vmatpush1.msra.mxu0 0.0
    %499 = vmatprep.subr.mxu0 0.0
    %500 = vmatpush1.msra.mxu0 %v464
    %501 = vmatprep.subr.mxu0 0.0
    %502 = vmatpush2.msra.mxu0 0.0
    %503 = vmatprep.subr.mxu0 0.0
    %504 = vmatpush2.msra.mxu0 0.0
    %505 = vmatprep.subr.mxu0 0.0
    %506 = vmatpush2.msra.mxu0 0.0
    %507 = vmatprep.subr.mxu0 0.0
    %508 = vmatpush2.msra.mxu0 0.0
    %509 = vmatprep.subr.mxu0 0.0
    %510 = vmatpush2.msra.mxu0 0.0
    %511 = vmatprep.subr.mxu0 0.0
    %512 = vmatpush2.msra.mxu0 0.0
    %513 = vmatprep.subr.mxu0 0.0
    %514 = vmatpush2.msra.mxu0 0.0
    %515 = vmatprep.subr.mxu0 0.0
    %516 = vmatpush2.msra.mxu0 0.0
    %517 = vmatprep.subr.mxu0 0.0
    %518 = vmatpush2.msra.mxu0 0.0
    %519 = vmatprep.subr.mxu0 0.0
    %520 = vmatpush2.msra.mxu0 0.0
    %521 = vmatprep.subr.mxu0 0.0
    %522 = vmatpush2.msra.mxu0 0.0
    %523 = vmatprep.subr.mxu0 0.0
    %524 = vmatpush2.msra.mxu0 0.0
    %525 = vmatprep.subr.mxu0 0.0
    %526 = vmatpush2.msra.mxu0 0.0
    %527 = vmatprep.subr.mxu0 0.0
    %528 = vmatpush2.msra.mxu0 0.0
    %529 = vmatprep.subr.mxu0 0.0
    %530 = vmatpush2.msra.mxu0 0.0
    %531 = vmatprep.subr.mxu0 0.0
    %532 = vmatpush2.msra.mxu0 0.0
    %533 = vmatprep.mubr.f32.mxu0 0.0
    %534 = vmatmul.mubr.f32.gmra.mxu0 %v467
    %v535 = vpop.f32.mrf.mxu0
    %v536 = vadd.f32 0.0, %v535
    %v537 = vpop.f32.mrf.mxu0
    %538 = vdwg.mxu0
    %539 = vrot.lane.b32.xlu0 %v205, 112
    %v540 = vpop.permute.xlu0 %539
    %541 = vrot.lane.b32.xlu0 %v197, 80
    %v542 = vpop.permute.xlu0 %541
    %v543 = vsel %vm210, %v540, 0
    %v545 = vsel %vm210, %v542, 0
    %547 = vmatprep.subr.mxu0 0.0
    %548 = vmatpush1.xpose.msra.mxu0 0.0
    %549 = vmatprep.subr.mxu0 0.0
    %550 = vmatpush1.xpose.msra.mxu0 0.0
    %551 = vmatprep.subr.mxu0 0.0
    %552 = vmatpush1.xpose.msra.mxu0 0.0
    %553 = vmatprep.subr.mxu0 0.0
    %554 = vmatpush1.xpose.msra.mxu0 0.0
    %555 = vmatprep.subr.mxu0 0.0
    %556 = vmatpush1.xpose.msra.mxu0 0.0
    %557 = vmatprep.subr.mxu0 0.0
    %558 = vmatpush1.xpose.msra.mxu0 0.0
    %559 = vmatprep.subr.mxu0 0.0
    %560 = vmatpush1.xpose.msra.mxu0 0.0
    %561 = vmatprep.subr.mxu0 0.0
    %562 = vmatpush1.xpose.msra.mxu0 0.0
    %563 = vmatprep.subr.mxu0 0.0
    %564 = vmatpush1.xpose.msra.mxu0 0.0
    %565 = vmatprep.subr.mxu0 0.0
    %566 = vmatpush1.xpose.msra.mxu0 0.0
    %567 = vmatprep.subr.mxu0 0.0
    %568 = vmatpush1.xpose.msra.mxu0 0.0
    %569 = vmatprep.subr.mxu0 0.0
    %570 = vmatpush1.xpose.msra.mxu0 0.0
    %571 = vmatprep.subr.mxu0 0.0
    %572 = vmatpush1.xpose.msra.mxu0 0.0
    %573 = vmatprep.subr.mxu0 0.0
    %574 = vmatpush1.xpose.msra.mxu0 0.0
    %575 = vmatprep.subr.mxu0 0.0
    %576 = vmatpush1.xpose.msra.mxu0 0.0
    %577 = vmatprep.subr.mxu0 0.0
    %578 = vmatpush1.xpose.msra.mxu0 %v545
    %579 = vmatprep.subr.mxu0 0.0
    %580 = vmatpush2.xpose.msra.mxu0 0.0
    %581 = vmatprep.subr.mxu0 0.0
    %582 = vmatpush2.xpose.msra.mxu0 0.0
    %583 = vmatprep.subr.mxu0 0.0
    %584 = vmatpush2.xpose.msra.mxu0 0.0
    %585 = vmatprep.subr.mxu0 0.0
    %586 = vmatpush2.xpose.msra.mxu0 0.0
    %587 = vmatprep.subr.mxu0 0.0
    %588 = vmatpush2.xpose.msra.mxu0 0.0
    %589 = vmatprep.subr.mxu0 0.0
    %590 = vmatpush2.xpose.msra.mxu0 0.0
    %591 = vmatprep.subr.mxu0 0.0
    %592 = vmatpush2.xpose.msra.mxu0 0.0
    %593 = vmatprep.subr.mxu0 0.0
    %594 = vmatpush2.xpose.msra.mxu0 0.0
    %595 = vmatprep.subr.mxu0 0.0
    %596 = vmatpush2.xpose.msra.mxu0 0.0
    %597 = vmatprep.subr.mxu0 0.0
    %598 = vmatpush2.xpose.msra.mxu0 0.0
    %599 = vmatprep.subr.mxu0 0.0
    %600 = vmatpush2.xpose.msra.mxu0 0.0
    %601 = vmatprep.subr.mxu0 0.0
    %602 = vmatpush2.xpose.msra.mxu0 0.0
    %603 = vmatprep.subr.mxu0 0.0
    %604 = vmatpush2.xpose.msra.mxu0 0.0
    %605 = vmatprep.subr.mxu0 0.0
    %606 = vmatpush2.xpose.msra.mxu0 0.0
    %607 = vmatprep.subr.mxu0 0.0
    %608 = vmatpush2.xpose.msra.mxu0 0.0
    %609 = vmatprep.subr.mxu0 0.0
    %610 = vmatpush2.xpose.msra.mxu0 0.0
    %611 = vmatprep.mubr.f32.mxu0 0.0
    %612 = vmatmul.mubr.f32.gmra.mxu0 %v543
    %v613 = vpop.f32.mrf.mxu0
    %v614 = vadd.f32 0.0, %v613
    %v615 = vpop.f32.mrf.mxu0
    %616 = vdwg.mxu0
    %617 = vrot.lane.b32.xlu0 %v206, 112
    %v618 = vpop.permute.xlu0 %617
    %619 = vrot.lane.b32.xlu0 %v202, 80
    %v620 = vpop.permute.xlu0 %619
    %v621 = vsel %vm210, %v618, 0
    %v623 = vsel %vm210, %v620, 0
    %625 = vmatprep.subr.mxu0 0.0
    %626 = vmatpush1.xpose.msra.mxu0 0.0
    %627 = vmatprep.subr.mxu0 0.0
    %628 = vmatpush1.xpose.msra.mxu0 0.0
    %629 = vmatprep.subr.mxu0 0.0
    %630 = vmatpush1.xpose.msra.mxu0 0.0
    %631 = vmatprep.subr.mxu0 0.0
    %632 = vmatpush1.xpose.msra.mxu0 0.0
    %633 = vmatprep.subr.mxu0 0.0
    %634 = vmatpush1.xpose.msra.mxu0 0.0
    %635 = vmatprep.subr.mxu0 0.0
    %636 = vmatpush1.xpose.msra.mxu0 0.0
    %637 = vmatprep.subr.mxu0 0.0
    %638 = vmatpush1.xpose.msra.mxu0 0.0
    %639 = vmatprep.subr.mxu0 0.0
    %640 = vmatpush1.xpose.msra.mxu0 0.0
    %641 = vmatprep.subr.mxu0 0.0
    %642 = vmatpush1.xpose.msra.mxu0 0.0
    %643 = vmatprep.subr.mxu0 0.0
    %644 = vmatpush1.xpose.msra.mxu0 0.0
    %645 = vmatprep.subr.mxu0 0.0
    %646 = vmatpush1.xpose.msra.mxu0 0.0
    %647 = vmatprep.subr.mxu0 0.0
    %648 = vmatpush1.xpose.msra.mxu0 0.0
    %649 = vmatprep.subr.mxu0 0.0
    %650 = vmatpush1.xpose.msra.mxu0 0.0
    %651 = vmatprep.subr.mxu0 0.0
    %652 = vmatpush1.xpose.msra.mxu0 0.0
    %653 = vmatprep.subr.mxu0 0.0
    %654 = vmatpush1.xpose.msra.mxu0 0.0
    %655 = vmatprep.subr.mxu0 0.0
    %656 = vmatpush1.xpose.msra.mxu0 %v623
    %657 = vmatprep.subr.mxu0 0.0
    %658 = vmatpush2.xpose.msra.mxu0 0.0
    %659 = vmatprep.subr.mxu0 0.0
    %660 = vmatpush2.xpose.msra.mxu0 0.0
    %661 = vmatprep.subr.mxu0 0.0
    %662 = vmatpush2.xpose.msra.mxu0 0.0
    %663 = vmatprep.subr.mxu0 0.0
    %664 = vmatpush2.xpose.msra.mxu0 0.0
    %665 = vmatprep.subr.mxu0 0.0
    %666 = vmatpush2.xpose.msra.mxu0 0.0
    %667 = vmatprep.subr.mxu0 0.0
    %668 = vmatpush2.xpose.msra.mxu0 0.0
    %669 = vmatprep.subr.mxu0 0.0
    %670 = vmatpush2.xpose.msra.mxu0 0.0
    %671 = vmatprep.subr.mxu0 0.0
    %672 = vmatpush2.xpose.msra.mxu0 0.0
    %673 = vmatprep.subr.mxu0 0.0
    %674 = vmatpush2.xpose.msra.mxu0 0.0
    %675 = vmatprep.subr.mxu0 0.0
    %676 = vmatpush2.xpose.msra.mxu0 0.0
    %677 = vmatprep.subr.mxu0 0.0
    %678 = vmatpush2.xpose.msra.mxu0 0.0
    %679 = vmatprep.subr.mxu0 0.0
    %680 = vmatpush2.xpose.msra.mxu0 0.0
    %681 = vmatprep.subr.mxu0 0.0
    %682 = vmatpush2.xpose.msra.mxu0 0.0
    %683 = vmatprep.subr.mxu0 0.0
    %684 = vmatpush2.xpose.msra.mxu0 0.0
    %685 = vmatprep.subr.mxu0 0.0
    %686 = vmatpush2.xpose.msra.mxu0 0.0
    %687 = vmatprep.subr.mxu0 0.0
    %688 = vmatpush2.xpose.msra.mxu0 0.0
    %689 = vmatprep.mubr.f32.mxu0 0.0
    %690 = vmatmul.mubr.f32.gmra.mxu0 %v621
    %v691 = vpop.f32.mrf.mxu0
    %v692 = vadd.f32 0.0, %v691
    %v693 = vpop.f32.mrf.mxu0
    %694 = vdwg.mxu0
    %v695 = vsel %vm364, %v614, -inf
    %696 = vmax.xlane.f32.xlu0 %v695
    %v697 = vpop.xlane.xlu0 %696
    %v698 = vsel %vm364, %v692, -inf
    %699 = vmax.xlane.f32.xlu0 %v698
    %v700 = vpop.xlane.xlu0 %699
    %v701 = vsub.f32 %v614, %v697
    %v702 = vsub.f32 %v692, %v700
    %v703 = vmul.f32 %v701, 1.442695
    %v704 = vpow.pop %v703
    %v705 = vmul.f32 %v702, 1.442695
    %v706 = vpow.pop %v705
    %v707 = vsel %vm364, %v704, 0.0
    %708 = vadd.xlane.f32.xlu0 %v707
    %v709 = vpop.xlane.xlu0 %708
    %v710 = vsel %vm364, %v706, 0.0
    %711 = vadd.xlane.f32.xlu0 %v710
    %v712 = vpop.xlane.xlu0 %711
    %v713 = vrcp.pop %v709
    %v714 = vrcp.pop %v712
    %v715 = vmul.f32 %v704, %v713
    %v716 = vmul.f32 %v706, %v714
    %717 = vrot.lane.b32.xlu0 %v197, 48
    %v718 = vpop.permute.xlu0 %717
    %v721 = vsel %vm364, %v715, 0
    %723 = vmatprep.subr.mxu0 0.0
    %724 = vmatpush1.msra.mxu0 0.0
    %725 = vmatprep.subr.mxu0 0.0
    %726 = vmatpush1.msra.mxu0 0.0
    %727 = vmatprep.subr.mxu0 0.0
    %728 = vmatpush1.msra.mxu0 0.0
    %729 = vmatprep.subr.mxu0 0.0
    %730 = vmatpush1.msra.mxu0 0.0
    %731 = vmatprep.subr.mxu0 0.0
    %732 = vmatpush1.msra.mxu0 0.0
    %733 = vmatprep.subr.mxu0 0.0
    %734 = vmatpush1.msra.mxu0 0.0
    %735 = vmatprep.subr.mxu0 0.0
    %736 = vmatpush1.msra.mxu0 0.0
    %737 = vmatprep.subr.mxu0 0.0
    %738 = vmatpush1.msra.mxu0 0.0
    %739 = vmatprep.subr.mxu0 0.0
    %740 = vmatpush1.msra.mxu0 0.0
    %741 = vmatprep.subr.mxu0 0.0
    %742 = vmatpush1.msra.mxu0 0.0
    %743 = vmatprep.subr.mxu0 0.0
    %744 = vmatpush1.msra.mxu0 0.0
    %745 = vmatprep.subr.mxu0 0.0
    %746 = vmatpush1.msra.mxu0 0.0
    %747 = vmatprep.subr.mxu0 0.0
    %748 = vmatpush1.msra.mxu0 0.0
    %749 = vmatprep.subr.mxu0 0.0
    %750 = vmatpush1.msra.mxu0 0.0
    %751 = vmatprep.subr.mxu0 0.0
    %752 = vmatpush1.msra.mxu0 0.0
    %753 = vmatprep.subr.mxu0 0.0
    %754 = vmatpush1.msra.mxu0 %v718
    %755 = vmatprep.subr.mxu0 0.0
    %756 = vmatpush2.msra.mxu0 0.0
    %757 = vmatprep.subr.mxu0 0.0
    %758 = vmatpush2.msra.mxu0 0.0
    %759 = vmatprep.subr.mxu0 0.0
    %760 = vmatpush2.msra.mxu0 0.0
    %761 = vmatprep.subr.mxu0 0.0
    %762 = vmatpush2.msra.mxu0 0.0
    %763 = vmatprep.subr.mxu0 0.0
    %764 = vmatpush2.msra.mxu0 0.0
    %765 = vmatprep.subr.mxu0 0.0
    %766 = vmatpush2.msra.mxu0 0.0
    %767 = vmatprep.subr.mxu0 0.0
    %768 = vmatpush2.msra.mxu0 0.0
    %769 = vmatprep.subr.mxu0 0.0
    %770 = vmatpush2.msra.mxu0 0.0
    %771 = vmatprep.subr.mxu0 0.0
    %772 = vmatpush2.msra.mxu0 0.0
    %773 = vmatprep.subr.mxu0 0.0
    %774 = vmatpush2.msra.mxu0 0.0
    %775 = vmatprep.subr.mxu0 0.0
    %776 = vmatpush2.msra.mxu0 0.0
    %777 = vmatprep.subr.mxu0 0.0
    %778 = vmatpush2.msra.mxu0 0.0
    %779 = vmatprep.subr.mxu0 0.0
    %780 = vmatpush2.msra.mxu0 0.0
    %781 = vmatprep.subr.mxu0 0.0
    %782 = vmatpush2.msra.mxu0 0.0
    %783 = vmatprep.subr.mxu0 0.0
    %784 = vmatpush2.msra.mxu0 0.0
    %785 = vmatprep.subr.mxu0 0.0
    %786 = vmatpush2.msra.mxu0 0.0
    %787 = vmatprep.mubr.f32.mxu0 0.0
    %788 = vmatmul.mubr.f32.gmra.mxu0 %v721
    %v789 = vpop.f32.mrf.mxu0
    %v790 = vadd.f32 0.0, %v789
    %v791 = vpop.f32.mrf.mxu0
    %792 = vdwg.mxu0
    %793 = vrot.lane.b32.xlu0 %v202, 48
    %v794 = vpop.permute.xlu0 %793
    %v797 = vsel %vm364, %v716, 0
    %799 = vmatprep.subr.mxu0 0.0
    %800 = vmatpush1.msra.mxu0 0.0
    %801 = vmatprep.subr.mxu0 0.0
    %802 = vmatpush1.msra.mxu0 0.0
    %803 = vmatprep.subr.mxu0 0.0
    %804 = vmatpush1.msra.mxu0 0.0
    %805 = vmatprep.subr.mxu0 0.0
    %806 = vmatpush1.msra.mxu0 0.0
    %807 = vmatprep.subr.mxu0 0.0
    %808 = vmatpush1.msra.mxu0 0.0
    %809 = vmatprep.subr.mxu0 0.0
    %810 = vmatpush1.msra.mxu0 0.0
    %811 = vmatprep.subr.mxu0 0.0
    %812 = vmatpush1.msra.mxu0 0.0
    %813 = vmatprep.subr.mxu0 0.0
    %814 = vmatpush1.msra.mxu0 0.0
    %815 = vmatprep.subr.mxu0 0.0
    %816 = vmatpush1.msra.mxu0 0.0
    %817 = vmatprep.subr.mxu0 0.0
    %818 = vmatpush1.msra.mxu0 0.0
    %819 = vmatprep.subr.mxu0 0.0
    %820 = vmatpush1.msra.mxu0 0.0
    %821 = vmatprep.subr.mxu0 0.0
    %822 = vmatpush1.msra.mxu0 0.0
    %823 = vmatprep.subr.mxu0 0.0
    %824 = vmatpush1.msra.mxu0 0.0
    %825 = vmatprep.subr.mxu0 0.0
    %826 = vmatpush1.msra.mxu0 0.0
    %827 = vmatprep.subr.mxu0 0.0
    %828 = vmatpush1.msra.mxu0 0.0
    %829 = vmatprep.subr.mxu0 0.0
    %830 = vmatpush1.msra.mxu0 %v794
    %831 = vmatprep.subr.mxu0 0.0
    %832 = vmatpush2.msra.mxu0 0.0
    %833 = vmatprep.subr.mxu0 0.0
    %834 = vmatpush2.msra.mxu0 0.0
    %835 = vmatprep.subr.mxu0 0.0
    %836 = vmatpush2.msra.mxu0 0.0
    %837 = vmatprep.subr.mxu0 0.0
    %838 = vmatpush2.msra.mxu0 0.0
    %839 = vmatprep.subr.mxu0 0.0
    %840 = vmatpush2.msra.mxu0 0.0
    %841 = vmatprep.subr.mxu0 0.0
    %842 = vmatpush2.msra.mxu0 0.0
    %843 = vmatprep.subr.mxu0 0.0
    %844 = vmatpush2.msra.mxu0 0.0
    %845 = vmatprep.subr.mxu0 0.0
    %846 = vmatpush2.msra.mxu0 0.0
    %847 = vmatprep.subr.mxu0 0.0
    %848 = vmatpush2.msra.mxu0 0.0
    %849 = vmatprep.subr.mxu0 0.0
    %850 = vmatpush2.msra.mxu0 0.0
    %851 = vmatprep.subr.mxu0 0.0
    %852 = vmatpush2.msra.mxu0 0.0
    %853 = vmatprep.subr.mxu0 0.0
    %854 = vmatpush2.msra.mxu0 0.0
    %855 = vmatprep.subr.mxu0 0.0
    %856 = vmatpush2.msra.mxu0 0.0
    %857 = vmatprep.subr.mxu0 0.0
    %858 = vmatpush2.msra.mxu0 0.0
    %859 = vmatprep.subr.mxu0 0.0
    %860 = vmatpush2.msra.mxu0 0.0
    %861 = vmatprep.subr.mxu0 0.0
    %862 = vmatpush2.msra.mxu0 0.0
    %863 = vmatprep.mubr.f32.mxu0 0.0
    %864 = vmatmul.mubr.f32.gmra.mxu0 %v797
    %v865 = vpop.f32.mrf.mxu0
    %v866 = vadd.f32 0.0, %v865
    %v867 = vpop.f32.mrf.mxu0
    %868 = vdwg.mxu0
    %871 = vrot.lane.b32.xlu0 %v790, 16
    %v872 = vpop.permute.xlu0 %871
    %873 = vrot.lane.b32.xlu0 %v866, 16
    %v874 = vpop.permute.xlu0 %873
    %v877 = vsel %vm210, %v460, %v872
    %v878 = vsel %vm210, %v536, %v874
    %v879 = vld [vmem:[%s5] sm:$0xff]
    %v880 = vld [vmem:[%s5 + $0x8] sm:$0xff]
    %v881 = vld [vmem:[%s5 + $0x10] sm:$0xff]
    %v882 = vld [vmem:[%s5 + $0x18] sm:$0xff]
    %v883 = vld [vmem:[%s6] sm:$0x1]
    %v885 = vlaneseq
    %v886 = vshrl.u32 %v885, 7
    %v887 = vsub.s32 0, %v886
    %v888 = vrot.slane %v883, %v887
    %v891 = vsel %vm69, %v877, 0
    %v894 = vsel %vm69, %v878, 0
    %896 = vmatprep.subr.mxu0 0.0
    %897 = vmatpush1.msra.mxu0 0.0
    %898 = vmatprep.subr.mxu0 0.0
    %899 = vmatpush1.msra.mxu0 0.0
    %900 = vmatprep.subr.mxu0 0.0
    %901 = vmatpush1.msra.mxu0 0.0
    %902 = vmatprep.subr.mxu0 0.0
    %903 = vmatpush1.msra.mxu0 0.0
    %904 = vmatprep.subr.mxu0 0.0
    %905 = vmatpush1.msra.mxu0 0.0
    %906 = vmatprep.subr.mxu0 0.0
    %907 = vmatpush1.msra.mxu0 0.0
    %908 = vmatprep.subr.mxu0 0.0
    %909 = vmatpush1.msra.mxu0 0.0
    %910 = vmatprep.subr.mxu0 0.0
    %911 = vmatpush1.msra.mxu0 0.0
    %912 = vmatprep.subr.mxu0 0.0
    %913 = vmatpush1.msra.mxu0 0.0
    %914 = vmatprep.subr.mxu0 0.0
    %915 = vmatpush1.msra.mxu0 0.0
    %916 = vmatprep.subr.mxu0 0.0
    %917 = vmatpush1.msra.mxu0 0.0
    %918 = vmatprep.subr.mxu0 0.0
    %919 = vmatpush1.msra.mxu0 0.0
    %920 = vmatprep.subr.mxu0 0.0
    %921 = vmatpush1.msra.mxu0 %v882
    %922 = vmatprep.subr.mxu0 0.0
    %923 = vmatpush1.msra.mxu0 %v881
    %924 = vmatprep.subr.mxu0 0.0
    %925 = vmatpush1.msra.mxu0 %v880
    %926 = vmatprep.subr.mxu0 0.0
    %927 = vmatpush1.msra.mxu0 %v879
    %928 = vmatprep.subr.mxu0 0.0
    %929 = vmatpush2.msra.mxu0 0.0
    %930 = vmatprep.subr.mxu0 0.0
    %931 = vmatpush2.msra.mxu0 0.0
    %932 = vmatprep.subr.mxu0 0.0
    %933 = vmatpush2.msra.mxu0 0.0
    %934 = vmatprep.subr.mxu0 0.0
    %935 = vmatpush2.msra.mxu0 0.0
    %936 = vmatprep.subr.mxu0 0.0
    %937 = vmatpush2.msra.mxu0 0.0
    %938 = vmatprep.subr.mxu0 0.0
    %939 = vmatpush2.msra.mxu0 0.0
    %940 = vmatprep.subr.mxu0 0.0
    %941 = vmatpush2.msra.mxu0 0.0
    %942 = vmatprep.subr.mxu0 0.0
    %943 = vmatpush2.msra.mxu0 0.0
    %944 = vmatprep.subr.mxu0 0.0
    %945 = vmatpush2.msra.mxu0 0.0
    %946 = vmatprep.subr.mxu0 0.0
    %947 = vmatpush2.msra.mxu0 0.0
    %948 = vmatprep.subr.mxu0 0.0
    %949 = vmatpush2.msra.mxu0 0.0
    %950 = vmatprep.subr.mxu0 0.0
    %951 = vmatpush2.msra.mxu0 0.0
    %952 = vmatprep.subr.mxu0 0.0
    %953 = vmatpush2.msra.mxu0 0.0
    %954 = vmatprep.subr.mxu0 0.0
    %955 = vmatpush2.msra.mxu0 0.0
    %956 = vmatprep.subr.mxu0 0.0
    %957 = vmatpush2.msra.mxu0 0.0
    %958 = vmatprep.subr.mxu0 0.0
    %959 = vmatpush2.msra.mxu0 0.0
    %960 = vmatprep.mubr.f32.mxu0 0.0
    %961 = vmatmul.mubr.f32.gmra.mxu0 %v891
    %v962 = vpop.f32.mrf.mxu0
    %v963 = vadd.f32 %v888, %v962
    %v964 = vpop.f32.mrf.mxu0
    %965 = vmatprep.mubr.f32.mxu0 0.0
    %966 = vmatmul.mubr.f32.gmra.mxu0 %v894
    %v967 = vpop.f32.mrf.mxu0
    %v968 = vadd.f32 %v888, %v967
    %v969 = vpop.f32.mrf.mxu0
    %970 = vdwg.mxu0
    %v971 = vadd.f32 %v111, %v963
    %v972 = vadd.f32 %v112, %v968
    %v973 = vld [vmem:[%s7] sm:$0x1]
    %v974 = vld [vmem:[%s8] sm:$0x1]
    %v975 = vsel %vm69, %v971, 0.0
    %976 = vadd.xlane.f32.xlu0 %v975
    %v977 = vpop.xlane.xlu0 %976
    %v978 = vsel %vm69, %v972, 0.0
    %979 = vadd.xlane.f32.xlu0 %v978
    %v980 = vpop.xlane.xlu0 %979
    %v981 = vmul.f32 %v977, %v76
    %v982 = vmul.f32 %v980, %v76
    %v983 = vsub.f32 %v971, %v981
    %v984 = vsub.f32 %v972, %v982
    %v985 = vmul.f32 %v983, %v983
    %v986 = vmul.f32 %v984, %v984
    %v987 = vsel %vm69, %v985, 0.0
    %988 = vadd.xlane.f32.xlu0 %v987
    %v989 = vpop.xlane.xlu0 %988
    %v990 = vsel %vm69, %v986, 0.0
    %991 = vadd.xlane.f32.xlu0 %v990
    %v992 = vpop.xlane.xlu0 %991
    %v993 = vmul.f32 %v989, %v76
    %v994 = vmul.f32 %v992, %v76
    %v995 = vadd.f32 %v993, 1e-12
    %v996 = vadd.f32 %v994, 1e-12
    %v997 = vrsqrt.pop %v995
    %v998 = vrsqrt.pop %v996
    %v999 = vmul.f32 %v983, %v997
    %v1000 = vmul.f32 %v984, %v998
    %v1002 = vlaneseq
    %v1003 = vshrl.u32 %v1002, 7
    %v1004 = vsub.s32 0, %v1003
    %v1005 = vrot.slane %v973, %v1004
    %v1007 = vmul.f32 %v999, %v1005
    %v1008 = vmul.f32 %v1000, %v1005
    %v1010 = vlaneseq
    %v1011 = vshrl.u32 %v1010, 7
    %v1012 = vsub.s32 0, %v1011
    %v1013 = vrot.slane %v974, %v1012
    %v1015 = vadd.f32 %v1007, %v1013
    %v1016 = vadd.f32 %v1008, %v1013
    %v1017 = vld [vmem:[%s9] sm:$0xff]
    %v1018 = vld [vmem:[%s9 + $0x8] sm:$0xff]
    %v1019 = vld [vmem:[%s9 + $0x10] sm:$0xff]
    %v1020 = vld [vmem:[%s9 + $0x18] sm:$0xff]
    %v1021 = vld [vmem:[%s10] sm:$0x1]
    %v1023 = vlaneseq
    %v1024 = vshrl.u32 %v1023, 7
    %v1025 = vsub.s32 0, %v1024
    %v1026 = vrot.slane %v1021, %v1025
    %v1029 = vsel %vm69, %v1015, 0
    %v1032 = vsel %vm69, %v1016, 0
    %1034 = vmatprep.subr.mxu0 0.0
    %1035 = vmatpush1.msra.mxu0 0.0
    %1036 = vmatprep.subr.mxu0 0.0
    %1037 = vmatpush1.msra.mxu0 0.0
    %1038 = vmatprep.subr.mxu0 0.0
    %1039 = vmatpush1.msra.mxu0 0.0
    %1040 = vmatprep.subr.mxu0 0.0
    %1041 = vmatpush1.msra.mxu0 0.0
    %1042 = vmatprep.subr.mxu0 0.0
    %1043 = vmatpush1.msra.mxu0 0.0
    %1044 = vmatprep.subr.mxu0 0.0
    %1045 = vmatpush1.msra.mxu0 0.0
    %1046 = vmatprep.subr.mxu0 0.0
    %1047 = vmatpush1.msra.mxu0 0.0
    %1048 = vmatprep.subr.mxu0 0.0
    %1049 = vmatpush1.msra.mxu0 0.0
    %1050 = vmatprep.subr.mxu0 0.0
    %1051 = vmatpush1.msra.mxu0 0.0
    %1052 = vmatprep.subr.mxu0 0.0
    %1053 = vmatpush1.msra.mxu0 0.0
    %1054 = vmatprep.subr.mxu0 0.0
    %1055 = vmatpush1.msra.mxu0 0.0
    %1056 = vmatprep.subr.mxu0 0.0
    %1057 = vmatpush1.msra.mxu0 0.0
    %1058 = vmatprep.subr.mxu0 0.0
    %1059 = vmatpush1.msra.mxu0 %v1020
    %1060 = vmatprep.subr.mxu0 0.0
    %1061 = vmatpush1.msra.mxu0 %v1019
    %1062 = vmatprep.subr.mxu0 0.0
    %1063 = vmatpush1.msra.mxu0 %v1018
    %1064 = vmatprep.subr.mxu0 0.0
    %1065 = vmatpush1.msra.mxu0 %v1017
    %1066 = vmatprep.subr.mxu0 0.0
    %1067 = vmatpush2.msra.mxu0 0.0
    %1068 = vmatprep.subr.mxu0 0.0
    %1069 = vmatpush2.msra.mxu0 0.0
    %1070 = vmatprep.subr.mxu0 0.0
    %1071 = vmatpush2.msra.mxu0 0.0
    %1072 = vmatprep.subr.mxu0 0.0
    %1073 = vmatpush2.msra.mxu0 0.0
    %1074 = vmatprep.subr.mxu0 0.0
    %1075 = vmatpush2.msra.mxu0 0.0
    %1076 = vmatprep.subr.mxu0 0.0
    %1077 = vmatpush2.msra.mxu0 0.0
    %1078 = vmatprep.subr.mxu0 0.0
    %1079 = vmatpush2.msra.mxu0 0.0
    %1080 = vmatprep.subr.mxu0 0.0
    %1081 = vmatpush2.msra.mxu0 0.0
    %1082 = vmatprep.subr.mxu0 0.0
    %1083 = vmatpush2.msra.mxu0 0.0
    %1084 = vmatprep.subr.mxu0 0.0
    %1085 = vmatpush2.msra.mxu0 0.0
    %1086 = vmatprep.subr.mxu0 0.0
    %1087 = vmatpush2.msra.mxu0 0.0
    %1088 = vmatprep.subr.mxu0 0.0
    %1089 = vmatpush2.msra.mxu0 0.0
    %1090 = vmatprep.subr.mxu0 0.0
    %1091 = vmatpush2.msra.mxu0 0.0
    %1092 = vmatprep.subr.mxu0 0.0
    %1093 = vmatpush2.msra.mxu0 0.0
    %1094 = vmatprep.subr.mxu0 0.0
    %1095 = vmatpush2.msra.mxu0 0.0
    %1096 = vmatprep.subr.mxu0 0.0
    %1097 = vmatpush2.msra.mxu0 0.0
    %1098 = vmatprep.mubr.f32.mxu0 0.0
    %1099 = vmatmul.mubr.f32.gmra.mxu0 %v1029
    %v1100 = vpop.f32.mrf.mxu0
    %v1101 = vadd.f32 %v1026, %v1100
    %v1102 = vpop.f32.mrf.mxu0
    %1103 = vmatprep.mubr.f32.mxu0 0.0
    %1104 = vmatmul.mubr.f32.gmra.mxu0 %v1032
    %v1105 = vpop.f32.mrf.mxu0
    %v1106 = vadd.f32 %v1026, %v1105
    %v1107 = vpop.f32.mrf.mxu0
    %1108 = vdwg.mxu0
    %v1109 = vmul.f32 %v1101, 0.5
    %v1110 = vmul.f32 %v1106, 0.5
    %v1111 = vmul.f32 %v1101, 0.044715
    %v1112 = vmul.f32 %v1106, 0.044715
    %v1113 = vmul.f32 %v1111, %v1101
    %v1114 = vmul.f32 %v1112, %v1106
    %v1115 = vmul.f32 %v1113, %v1101
    %v1116 = vmul.f32 %v1114, %v1106
    %v1117 = vadd.f32 %v1101, %v1115
    %v1118 = vadd.f32 %v1106, %v1116
    %v1119 = vmul.f32 %v1117, 0.7978846
    %v1120 = vmul.f32 %v1118, 0.7978846
    %v1121 = vtanh.pop %v1119
    %v1122 = vtanh.pop %v1120
    %v1123 = vadd.f32 %v1121, 1.0
    %v1124 = vadd.f32 %v1122, 1.0
    %v1125 = vmul.f32 %v1109, %v1123
    %v1126 = vmul.f32 %v1110, %v1124
    %v1127 = vld [vmem:[%s11] sm:$0xff]
    %v1128 = vld [vmem:[%s11 + $0x8] sm:$0xff]
    %v1129 = vld [vmem:[%s11 + $0x10] sm:$0xff]
    %v1130 = vld [vmem:[%s11 + $0x18] sm:$0xff]
    %v1131 = vld [vmem:[%s11 + $0x20] sm:$0xff]
    %v1132 = vld [vmem:[%s11 + $0x28] sm:$0xff]
    %v1133 = vld [vmem:[%s11 + $0x30] sm:$0xff]
    %v1134 = vld [vmem:[%s11 + $0x38] sm:$0xff]
    %v1135 = vld [vmem:[%s12] sm:$0x1]
    %v1137 = vlaneseq
    %v1138 = vshrl.u32 %v1137, 7
    %v1139 = vsub.s32 0, %v1138
    %v1140 = vrot.slane %v1135, %v1139
    %vm1142 = vcmask 523264
    %v1144 = vsel %vm1142, %v1125, 0
    %v1147 = vsel %vm1142, %v1126, 0
    %1149 = vmatprep.subr.mxu0 0.0
    %1150 = vmatpush1.msra.mxu0 0.0
    %1151 = vmatprep.subr.mxu0 0.0
    %1152 = vmatpush1.msra.mxu0 0.0
    %1153 = vmatprep.subr.mxu0 0.0
    %1154 = vmatpush1.msra.mxu0 0.0
    %1155 = vmatprep.subr.mxu0 0.0
    %1156 = vmatpush1.msra.mxu0 0.0
    %1157 = vmatprep.subr.mxu0 0.0
    %1158 = vmatpush1.msra.mxu0 0.0
    %1159 = vmatprep.subr.mxu0 0.0
    %1160 = vmatpush1.msra.mxu0 0.0
    %1161 = vmatprep.subr.mxu0 0.0
    %1162 = vmatpush1.msra.mxu0 0.0
    %1163 = vmatprep.subr.mxu0 0.0
    %1164 = vmatpush1.msra.mxu0 0.0
    %1165 = vmatprep.subr.mxu0 0.0
    %1166 = vmatpush1.msra.mxu0 %v1134
    %1167 = vmatprep.subr.mxu0 0.0
    %1168 = vmatpush1.msra.mxu0 %v1133
    %1169 = vmatprep.subr.mxu0 0.0
    %1170 = vmatpush1.msra.mxu0 %v1132
    %1171 = vmatprep.subr.mxu0 0.0
    %1172 = vmatpush1.msra.mxu0 %v1131
    %1173 = vmatprep.subr.mxu0 0.0
    %1174 = vmatpush1.msra.mxu0 %v1130
    %1175 = vmatprep.subr.mxu0 0.0
    %1176 = vmatpush1.msra.mxu0 %v1129
    %1177 = vmatprep.subr.mxu0 0.0
    %1178 = vmatpush1.msra.mxu0 %v1128
    %1179 = vmatprep.subr.mxu0 0.0
    %1180 = vmatpush1.msra.mxu0 %v1127
    %1181 = vmatprep.subr.mxu0 0.0
    %1182 = vmatpush2.msra.mxu0 0.0
    %1183 = vmatprep.subr.mxu0 0.0
    %1184 = vmatpush2.msra.mxu0 0.0
    %1185 = vmatprep.subr.mxu0 0.0
    %1186 = vmatpush2.msra.mxu0 0.0
    %1187 = vmatprep.subr.mxu0 0.0
    %1188 = vmatpush2.msra.mxu0 0.0
    %1189 = vmatprep.subr.mxu0 0.0
    %1190 = vmatpush2.msra.mxu0 0.0
    %1191 = vmatprep.subr.mxu0 0.0
    %1192 = vmatpush2.msra.mxu0 0.0
    %1193 = vmatprep.subr.mxu0 0.0
    %1194 = vmatpush2.msra.mxu0 0.0
    %1195 = vmatprep.subr.mxu0 0.0
    %1196 = vmatpush2.msra.mxu0 0.0
    %1197 = vmatprep.subr.mxu0 0.0
    %1198 = vmatpush2.msra.mxu0 0.0
    %1199 = vmatprep.subr.mxu0 0.0
    %1200 = vmatpush2.msra.mxu0 0.0
    %1201 = vmatprep.subr.mxu0 0.0
    %1202 = vmatpush2.msra.mxu0 0.0
    %1203 = vmatprep.subr.mxu0 0.0
    %1204 = vmatpush2.msra.mxu0 0.0
    %1205 = vmatprep.subr.mxu0 0.0
    %1206 = vmatpush2.msra.mxu0 0.0
    %1207 = vmatprep.subr.mxu0 0.0
    %1208 = vmatpush2.msra.mxu0 0.0
    %1209 = vmatprep.subr.mxu0 0.0
    %1210 = vmatpush2.msra.mxu0 0.0
    %1211 = vmatprep.subr.mxu0 0.0
    %1212 = vmatpush2.msra.mxu0 0.0
    %1213 = vmatprep.mubr.f32.mxu0 0.0
    %1214 = vmatmul.mubr.f32.gmra.mxu0 %v1144
    %v1215 = vpop.f32.mrf.mxu0
    %v1216 = vadd.f32 %v1140, %v1215
    %v1217 = vpop.f32.mrf.mxu0
    %1218 = vmatprep.mubr.f32.mxu0 0.0
    %1219 = vmatmul.mubr.f32.gmra.mxu0 %v1147
    %v1220 = vpop.f32.mrf.mxu0
    %v1221 = vadd.f32 %v1140, %v1220
    %v1222 = vpop.f32.mrf.mxu0
    %1223 = vdwg.mxu0
    %v1224 = vadd.f32 %v1015, %v1216
    %v1225 = vadd.f32 %v1016, %v1221
    %v1226 = vld [vmem:[%s13] sm:$0x1]
    %v1227 = vld [vmem:[%s14] sm:$0x1]
    %v1228 = vsel %vm69, %v1224, 0.0
    %1229 = vadd.xlane.f32.xlu0 %v1228
    %v1230 = vpop.xlane.xlu0 %1229
    %v1231 = vsel %vm69, %v1225, 0.0
    %1232 = vadd.xlane.f32.xlu0 %v1231
    %v1233 = vpop.xlane.xlu0 %1232
    %v1234 = vmul.f32 %v1230, %v76
    %v1235 = vmul.f32 %v1233, %v76
    %v1236 = vsub.f32 %v1224, %v1234
    %v1237 = vsub.f32 %v1225, %v1235
    %v1238 = vmul.f32 %v1236, %v1236
    %v1239 = vmul.f32 %v1237, %v1237
    %v1240 = vsel %vm69, %v1238, 0.0
    %1241 = vadd.xlane.f32.xlu0 %v1240
    %v1242 = vpop.xlane.xlu0 %1241
    %v1243 = vsel %vm69, %v1239, 0.0
    %1244 = vadd.xlane.f32.xlu0 %v1243
    %v1245 = vpop.xlane.xlu0 %1244
    %v1246 = vmul.f32 %v1242, %v76
    %v1247 = vmul.f32 %v1245, %v76
    %v1248 = vadd.f32 %v1246, 1e-12
    %v1249 = vadd.f32 %v1247, 1e-12
    %v1250 = vrsqrt.pop %v1248
    %v1251 = vrsqrt.pop %v1249
    %v1252 = vmul.f32 %v1236, %v1250
    %v1253 = vmul.f32 %v1237, %v1251
    %v1255 = vlaneseq
    %v1256 = vshrl.u32 %v1255, 7
    %v1257 = vsub.s32 0, %v1256
    %v1258 = vrot.slane %v1226, %v1257
    %v1260 = vmul.f32 %v1252, %v1258
    %v1261 = vmul.f32 %v1253, %v1258
    %v1263 = vlaneseq
    %v1264 = vshrl.u32 %v1263, 7
    %v1265 = vsub.s32 0, %v1264
    %v1266 = vrot.slane %v1227, %v1265
    %v1268 = vadd.f32 %v1260, %v1266
    %v1269 = vadd.f32 %v1261, %v1266
    %v1270 = vld [vmem:[%s15] sm:$0xff]
    %v1271 = vld [vmem:[%s15 + $0x8] sm:$0xff]
    %v1272 = vld [vmem:[%s15 + $0x10] sm:$0xff]
    %v1273 = vld [vmem:[%s15 + $0x18] sm:$0xff]
    %v1274 = vld [vmem:[%s16] sm:$0x1]
    %v1276 = vlaneseq
    %v1277 = vshrl.u32 %v1276, 7
    %v1278 = vsub.s32 0, %v1277
    %v1279 = vrot.slane %v1274, %v1278
    %v1283 = vrot.slane %v1269, 7
    %vm1284 = vcmask 1041409
    %v1285 = vsel %vm1284, %v1283, %v1268
    %v1286 = vsel %vm69, %v1285, 0
    %1288 = vmatprep.subr.mxu0 0.0
    %1289 = vmatpush1.msra.mxu0 0.0
    %1290 = vmatprep.subr.mxu0 0.0
    %1291 = vmatpush1.msra.mxu0 0.0
    %1292 = vmatprep.subr.mxu0 0.0
    %1293 = vmatpush1.msra.mxu0 0.0
    %1294 = vmatprep.subr.mxu0 0.0
    %1295 = vmatpush1.msra.mxu0 0.0
    %1296 = vmatprep.subr.mxu0 0.0
    %1297 = vmatpush1.msra.mxu0 0.0
    %1298 = vmatprep.subr.mxu0 0.0
    %1299 = vmatpush1.msra.mxu0 0.0
    %1300 = vmatprep.subr.mxu0 0.0
    %1301 = vmatpush1.msra.mxu0 0.0
    %1302 = vmatprep.subr.mxu0 0.0
    %1303 = vmatpush1.msra.mxu0 0.0
    %1304 = vmatprep.subr.mxu0 0.0
    %1305 = vmatpush1.msra.mxu0 0.0
    %1306 = vmatprep.subr.mxu0 0.0
    %1307 = vmatpush1.msra.mxu0 0.0
    %1308 = vmatprep.subr.mxu0 0.0
    %1309 = vmatpush1.msra.mxu0 0.0
    %1310 = vmatprep.subr.mxu0 0.0
    %1311 = vmatpush1.msra.mxu0 0.0
    %1312 = vmatprep.subr.mxu0 0.0
    %1313 = vmatpush1.msra.mxu0 %v1273
    %1314 = vmatprep.subr.mxu0 0.0
    %1315 = vmatpush1.msra.mxu0 %v1272
    %1316 = vmatprep.subr.mxu0 0.0
    %1317 = vmatpush1.msra.mxu0 %v1271
    %1318 = vmatprep.subr.mxu0 0.0
    %1319 = vmatpush1.msra.mxu0 %v1270
    %1320 = vmatprep.subr.mxu0 0.0
    %1321 = vmatpush2.msra.mxu0 0.0
    %1322 = vmatprep.subr.mxu0 0.0
    %1323 = vmatpush2.msra.mxu0 0.0
    %1324 = vmatprep.subr.mxu0 0.0
    %1325 = vmatpush2.msra.mxu0 0.0
    %1326 = vmatprep.subr.mxu0 0.0
    %1327 = vmatpush2.msra.mxu0 0.0
    %1328 = vmatprep.subr.mxu0 0.0
    %1329 = vmatpush2.msra.mxu0 0.0
    %1330 = vmatprep.subr.mxu0 0.0
    %1331 = vmatpush2.msra.mxu0 0.0
    %1332 = vmatprep.subr.mxu0 0.0
    %1333 = vmatpush2.msra.mxu0 0.0
    %1334 = vmatprep.subr.mxu0 0.0
    %1335 = vmatpush2.msra.mxu0 0.0
    %1336 = vmatprep.subr.mxu0 0.0
    %1337 = vmatpush2.msra.mxu0 0.0
    %1338 = vmatprep.subr.mxu0 0.0
    %1339 = vmatpush2.msra.mxu0 0.0
    %1340 = vmatprep.subr.mxu0 0.0
    %1341 = vmatpush2.msra.mxu0 0.0
    %1342 = vmatprep.subr.mxu0 0.0
    %1343 = vmatpush2.msra.mxu0 0.0
    %1344 = vmatprep.subr.mxu0 0.0
    %1345 = vmatpush2.msra.mxu0 0.0
    %1346 = vmatprep.subr.mxu0 0.0
    %1347 = vmatpush2.msra.mxu0 0.0
    %1348 = vmatprep.subr.mxu0 0.0
    %1349 = vmatpush2.msra.mxu0 0.0
    %1350 = vmatprep.subr.mxu0 0.0
    %1351 = vmatpush2.msra.mxu0 0.0
    %1352 = vmatprep.mubr.f32.mxu0 0.0
    %1353 = vmatmul.mubr.f32.gmra.mxu0 %v1286
    %v1354 = vpop.f32.mrf.mxu0
    %v1355 = vadd.f32 %v1279, %v1354
    %v1356 = vpop.f32.mrf.mxu0
    %1357 = vdwg.mxu0
    %v1358 = vtanh.pop %v1355
    %v1359 = vld [vmem:[%s17] sm:$0xff]
    %v1360 = vld [vmem:[%s17 + $0x8] sm:$0xff]
    %v1361 = vld [vmem:[%s17 + $0x10] sm:$0xff]
    %v1362 = vld [vmem:[%s17 + $0x18] sm:$0xff]
    %v1363 = vld [vmem:[%s18] sm:$0x1]
    %v1365 = vlaneseq
    %v1366 = vshrl.u32 %v1365, 7
    %v1367 = vsub.s32 0, %v1366
    %v1368 = vrot.slane %v1363, %v1367
    %v1371 = vsel %vm69, %v1358, 0
    %1373 = vmatprep.subr.mxu0 0.0
    %1374 = vmatpush1.msra.mxu0 0.0
    %1375 = vmatprep.subr.mxu0 0.0
    %1376 = vmatpush1.msra.mxu0 0.0
    %1377 = vmatprep.subr.mxu0 0.0
    %1378 = vmatpush1.msra.mxu0 0.0
    %1379 = vmatprep.subr.mxu0 0.0
    %1380 = vmatpush1.msra.mxu0 0.0
    %1381 = vmatprep.subr.mxu0 0.0
    %1382 = vmatpush1.msra.mxu0 0.0
    %1383 = vmatprep.subr.mxu0 0.0
    %1384 = vmatpush1.msra.mxu0 0.0
    %1385 = vmatprep.subr.mxu0 0.0
    %1386 = vmatpush1.msra.mxu0 0.0
    %1387 = vmatprep.subr.mxu0 0.0
    %1388 = vmatpush1.msra.mxu0 0.0
    %1389 = vmatprep.subr.mxu0 0.0
    %1390 = vmatpush1.msra.mxu0 0.0
    %1391 = vmatprep.subr.mxu0 0.0
    %1392 = vmatpush1.msra.mxu0 0.0
    %1393 = vmatprep.subr.mxu0 0.0
    %1394 = vmatpush1.msra.mxu0 0.0
    %1395 = vmatprep.subr.mxu0 0.0
    %1396 = vmatpush1.msra.mxu0 0.0
    %1397 = vmatprep.subr.mxu0 0.0
    %1398 = vmatpush1.msra.mxu0 %v1362
    %1399 = vmatprep.subr.mxu0 0.0
    %1400 = vmatpush1.msra.mxu0 %v1361
    %1401 = vmatprep.subr.mxu0 0.0
    %1402 = vmatpush1.msra.mxu0 %v1360
    %1403 = vmatprep.subr.mxu0 0.0
    %1404 = vmatpush1.msra.mxu0 %v1359
    %1405 = vmatprep.subr.mxu0 0.0
    %1406 = vmatpush2.msra.mxu0 0.0
    %1407 = vmatprep.subr.mxu0 0.0
    %1408 = vmatpush2.msra.mxu0 0.0
    %1409 = vmatprep.subr.mxu0 0.0
    %1410 = vmatpush2.msra.mxu0 0.0
    %1411 = vmatprep.subr.mxu0 0.0
    %1412 = vmatpush2.msra.mxu0 0.0
    %1413 = vmatprep.subr.mxu0 0.0
    %1414 = vmatpush2.msra.mxu0 0.0
    %1415 = vmatprep.subr.mxu0 0.0
    %1416 = vmatpush2.msra.mxu0 0.0
    %1417 = vmatprep.subr.mxu0 0.0
    %1418 = vmatpush2.msra.mxu0 0.0
    %1419 = vmatprep.subr.mxu0 0.0
    %1420 = vmatpush2.msra.mxu0 0.0
    %1421 = vmatprep.subr.mxu0 0.0
    %1422 = vmatpush2.msra.mxu0 0.0
    %1423 = vmatprep.subr.mxu0 0.0
    %1424 = vmatpush2.msra.mxu0 0.0
    %1425 = vmatprep.subr.mxu0 0.0
    %1426 = vmatpush2.msra.mxu0 0.0
    %1427 = vmatprep.subr.mxu0 0.0
    %1428 = vmatpush2.msra.mxu0 0.0
    %1429 = vmatprep.subr.mxu0 0.0
    %1430 = vmatpush2.msra.mxu0 0.0
    %1431 = vmatprep.subr.mxu0 0.0
    %1432 = vmatpush2.msra.mxu0 0.0
    %1433 = vmatprep.subr.mxu0 0.0
    %1434 = vmatpush2.msra.mxu0 0.0
    %1435 = vmatprep.subr.mxu0 0.0
    %1436 = vmatpush2.msra.mxu0 0.0
    %1437 = vmatprep.mubr.f32.mxu0 0.0
    %1438 = vmatmul.mubr.f32.gmra.mxu0 %v1371
    %v1439 = vpop.f32.mrf.mxu0
    %v1440 = vadd.f32 %v1368, %v1439
    %v1441 = vpop.f32.mrf.mxu0
    %1442 = vdwg.mxu0
    %vm1443 = vcmask 254976
    %1444 = vst.msk [vmem:[#allocation2] sm:$0x3] %vm1443, %v1358
    %vm1445 = vcmask 33792
    %1446 = vst.msk [vmem:[%s19] sm:$0x3] %vm1445, %v1440
    // Predicated region
    $region78: #{bert_spc_cl_forward.1} parent=1 // pred_check
      _
    $region79: #{bert_spc_cl_forward.1} parent=1 // pred_check_branch
      %1448 = sbr.rel (0) target = $region81
    $region80: #{bert_spc_cl_forward.1} parent=1 // pred_region
      _
    $region81: #{bert_spc_cl_forward.1} parent=1 // pred_fallthru
      _
    // Predicated region
    $region82: #{bert_spc_cl_forward.1} parent=1 // pred_check
      _
    $region83: #{bert_spc_cl_forward.1} parent=1 // pred_check_branch
      %1450 = sbr.rel (0) target = $region85
    $region84: #{bert_spc_cl_forward.1} parent=1 // pred_region
      %s1452 = ssub.s32 32, 32
      %1453 = vsyncadd [#allocation3], %s1452
      %s1455 = sshll.u32 [#allocation2], 4
      %s1456 = int_to_ptr.vmem [resolvable:$true] %s1455
      %1458 = dma.vmem_to_hbm [thread:$0]  %s1456, 32, %s20, [#allocation3]
    $region85: #{bert_spc_cl_forward.1} parent=1 // pred_fallthru
      _
    // Predicated region
    $region86: #{bert_spc_cl_forward.1} parent=1 // pred_check
      _
    $region87: #{bert_spc_cl_forward.1} parent=1 // pred_check_branch
      %1460 = sbr.rel (0) target = $region89
    $region88: #{bert_spc_cl_forward.1} parent=1 // pred_region
      _
    $region89: #{bert_spc_cl_forward.1} parent=1 // pred_fallthru
      _
    // Predicated region
    $region90: #{bert_spc_cl_forward.1} parent=1 // pred_check
      _
    $region91: #{bert_spc_cl_forward.1} parent=1 // pred_check_branch
      %1462 = sbr.rel (0) target = $region93
    $region92: #{bert_spc_cl_forward.1} parent=1 // pred_region
      %1463 = dma.done [#allocation3], 32
    $region93: #{bert_spc_cl_forward.1} parent=1 // pred_fallthru
      _
    %1464 = vsyncpa [#allocation3], 1

</llo_original>
